<compile_context>
chip_gen: v7x
topology: tpu7x:2x2x1
jax: 0.10.0
libtpu: 0.0.40
codegen_flags: <defaults>
</compile_context>

<pallas_src>
import functools

import jax
import jax.numpy as jnp
from jax.experimental import pallas as pl
from jax.experimental.pallas import tpu as pltpu


def forecaster_kernel(x_ref, w1_ref, b1_ref, w2_ref, b2_ref,
                      wf1_ref, bf1_ref, wf2_ref, bf2_ref,
                      out_ref, h1_ref, h2_ref, p2_ref, *, L, bblk, C):
    Lh = L // 2
    Lq = L // 4
    Nh = bblk * Lh
    Nq = bblk * Lq

    # --- conv1 + ReLU: taps were pre-concatenated (replicate-padded) in the
    # wrapper, so this is a single (bblk*L, 3F) @ (3F, C) matmul. -----------
    # TODO(synk): Dropout(0.2) after conv1 is identity at inference; training
    # mode dropout is not implemented.
    h1 = jnp.dot(x_ref[...], w1_ref[...],
                 preferred_element_type=jnp.float32) + b1_ref[...]
    h1_ref[...] = jnp.maximum(h1, 0.0)                              # (bblk*L, C)

    # --- MaxPool1d(2) #1: stride-2 sublane reads; pairs along the merged
    # (sample, position) axis never cross sample boundaries (L even). ------
    p1 = jnp.maximum(h1_ref[pl.ds(0, Nh, stride=2), :],
                     h1_ref[pl.ds(1, Nh, stride=2), :])             # (Nh, C) f32

    # --- conv2 + ReLU: replicate padding via shifted copies + edge masks,
    # three summed matmuls (no lane concat); each operand cast to bf16. ----
    # TODO(synk): pltpu.roll(axis=0) on bf16 would move this onto the XLU,
    # but packed-bf16 sublane rotates are a lowering risk; keep f32 concat.
    pos = jax.lax.broadcasted_iota(jnp.int32, (Nh, C), 0) % Lh
    pm1 = jnp.concatenate([p1[:1], p1[:-1]], axis=0)                # x[l-1]
    pm1 = jnp.where(pos == 0, p1, pm1)                              # replicate left
    pp1 = jnp.concatenate([p1[1:], p1[-1:]], axis=0)                # x[l+1]
    pp1 = jnp.where(pos == Lh - 1, p1, pp1)                         # replicate right
    h2 = (jnp.dot(pm1.astype(jnp.bfloat16), w2_ref[0:C, :],
                  preferred_element_type=jnp.float32)
          + jnp.dot(p1.astype(jnp.bfloat16), w2_ref[C:2 * C, :],
                    preferred_element_type=jnp.float32)
          + jnp.dot(pp1.astype(jnp.bfloat16), w2_ref[2 * C:3 * C, :],
                    preferred_element_type=jnp.float32)
          + b2_ref[...])
    h2_ref[...] = jnp.maximum(h2, 0.0)                              # (Nh, C)

    # --- MaxPool1d(2) #2, computed once into p2 scratch. ------------------
    # TODO(synk): bf16 h1/h2/p2 scratches would halve vst/vld traffic (v5e
    # store slot), but strided sublane reads on packed bf16 refs are a
    # lowering risk; kept f32.
    p2_ref[...] = jnp.maximum(h2_ref[pl.ds(0, Nq, stride=2), :],
                              h2_ref[pl.ds(1, Nq, stride=2), :])    # (Nq, C)

    # --- Flatten + FC1 + ReLU as an accumulation over positions:
    #     z[b] = sum_l p2[b*Lq + l] @ wf1[l*C:(l+1)*C]  (Lq stride-Lq gathers,
    #     no lane-misaligned concat; accumulator bounds live ranges). ------
    # Classifier Dropout = identity at inference.
    z = jnp.zeros((bblk, C), jnp.float32)
    for l in range(Lq):
        # TODO(synk): switch to lax.fori_loop for large Lq (long seq_len).
        rows = p2_ref[pl.ds(l, bblk, stride=Lq), :].astype(jnp.bfloat16)
        z = z + jnp.dot(rows, wf1_ref[l * C:(l + 1) * C, :],
                        preferred_element_type=jnp.float32)
    z = jnp.maximum(z + bf1_ref[...], 0.0).astype(jnp.bfloat16)     # (bblk, C)

    # --- FC2 -> lane-dense (bblk, OTp) output block (OTp multiple of 128). -
    out_ref[...] = (jnp.dot(z, wf2_ref[...], preferred_element_type=jnp.float32)
                    + bf2_ref[...])


def _round_up(v, m):
    return ((v + m - 1) // m) * m


def cnn1d_forecaster(x, params, output_seq_len, output_size, block_b=256):
    """x: (B, seq_len, n_features) f32 -> (B, output_seq_len, output_size) f32."""
    B, L, F = x.shape
    assert L % 4 == 0, "seq_len must be divisible by 4 (two MaxPool1d(2) stages)"
    C = params["b1"].shape[1]
    Lq = L // 4
    OT = output_seq_len * output_size
    OTp = _round_up(OT, 128)            # lane-dense output width

    # Block size: as large as VMEM/batch allow (MXU fill), but keep >= 2 grid
    # steps when B permits so v7x's two TensorCores both get work.
    bblk = max(8, min(block_b, _round_up(B, 8), _round_up(pl.cdiv(B, 2), 8)))
    n_blocks = pl.cdiv(B, bblk)
    Bpad = n_blocks * bblk

    # conv1 replicate padding + tap concat done once in XLA; bf16 input slab.
    xm1 = jnp.concatenate([x[:, :1, :], x[:, :-1, :]], axis=1)      # x[l-1]
    xp1 = jnp.concatenate([x[:, 1:, :], x[:, -1:, :]], axis=1)      # x[l+1]
    xcat = jnp.concatenate([xm1, x, xp1], axis=-1).astype(jnp.bfloat16)  # (B,L,3F)
    x2 = xcat.reshape(B * L, 3 * F)
    if Bpad != B:
        x2 = jnp.pad(x2, ((0, (Bpad - B) * L), (0, 0)))

    # Lane-pad FC2 weight/bias columns to OTp (dense vst path).
    wf2 = params["wf2"]
    bf2 = params["bf2"]
    if OTp != OT:
        wf2 = jnp.pad(wf2, ((0, 0), (0, OTp - OT)))
        bf2 = jnp.pad(bf2, ((0, 0), (0, OTp - OT)))

    kernel = functools.partial(forecaster_kernel, L=L, bblk=bblk, C=C)

    grid_spec = pltpu.PrefetchScalarGridSpec(
        num_scalar_prefetch=0,
        grid=(n_blocks,),
        in_specs=[
            pl.BlockSpec((bblk * L, 3 * F), lambda i: (i, 0)),  # pre-concat x (bf16)
            pl.BlockSpec((3 * F, C), lambda i: (0, 0)),         # conv1 weight (bf16)
            pl.BlockSpec((1, C), lambda i: (0, 0)),             # conv1 bias
            pl.BlockSpec((3 * C, C), lambda i: (0, 0)),         # conv2 weight (bf16)
            pl.BlockSpec((1, C), lambda i: (0, 0)),             # conv2 bias
            pl.BlockSpec((Lq * C, C), lambda i: (0, 0)),        # fc1 weight (bf16)
            pl.BlockSpec((1, C), lambda i: (0, 0)),             # fc1 bias
            pl.BlockSpec((C, OTp), lambda i: (0, 0)),           # fc2 weight (bf16, padded)
            pl.BlockSpec((1, OTp), lambda i: (0, 0)),           # fc2 bias (padded)
        ],
        out_specs=pl.BlockSpec((bblk, OTp), lambda i: (i, 0)),
        scratch_shapes=[
            pltpu.VMEM((bblk * L, C), jnp.float32),        # conv1 out (pool1 reads)
            pltpu.VMEM((bblk * L // 2, C), jnp.float32),   # conv2 out (pool2 reads)
            pltpu.VMEM((bblk * L // 4, C), jnp.float32),   # pooled (flatten gathers)
        ],
    )

    # TODO(synk): for production-scale flattened_size / bblk on v7x (64 MiB
    # VMEM), set vmem_limit_bytes, K-tile the fc1 matmul over the flat dim
    # (extra "arbitrary" grid axis + f32 accumulator), and single-buffer the
    # constant-index weight BlockSpecs.
    out = pl.pallas_call(
        kernel,
        out_shape=jax.ShapeDtypeStruct((Bpad, OTp), jnp.float32),
        grid_spec=grid_spec,
        compiler_params=pltpu.CompilerParams(dimension_semantics=("parallel",)),
    )(x2, params["w1"], params["b1"], params["w2"], params["b2"],
      params["wf1"], params["bf1"], wf2, bf2)

    return out[:B, :OT].reshape(B, output_seq_len, output_size)


def init_params(key, n_features, seq_len, out_channels, output_size, output_seq_len):
    """Deterministic synthetic parameters (PyTorch layouts) + kernel layouts."""
    C = out_channels
    F = n_features
    Lq = seq_len // 4
    flat = C * Lq                       # == self.flattened_size
    OT = output_size * output_seq_len
    ks = jax.random.split(key, 8)

    def u(k, shape, fan_in):
        bound = 1.0 / jnp.sqrt(jnp.float32(fan_in))
        return jax.random.uniform(k, shape, jnp.float32, -bound, bound)

    # PyTorch-native layouts
    w1_t = u(ks[0], (C, F, 3), F * 3)       # Conv1d weight (Cout, Cin, K)
    b1_t = u(ks[1], (C,), F * 3)
    w2_t = u(ks[2], (C, C, 3), C * 3)
    b2_t = u(ks[3], (C,), C * 3)
    wf1_t = u(ks[4], (C, flat), flat)       # Linear weight (out, in)
    bf1_t = u(ks[5], (C,), flat)
    wf2_t = u(ks[6], (OT, C), C)
    bf2_t = u(ks[7], (OT,), C)

    kernel_params = {
        # Conv weights: taps stacked on rows, row index = k*Cin + c (k=0 <-> x[l-1]).
        "w1": jnp.transpose(w1_t, (2, 1, 0)).reshape(3 * F, C).astype(jnp.bfloat16),
        "b1": b1_t.reshape(1, C),
        "w2": jnp.transpose(w2_t, (2, 1, 0)).reshape(3 * C, C).astype(jnp.bfloat16),
        "b2": b2_t.reshape(1, C),
        # PyTorch flatten index is c*Lq + l; kernel flat row index is l*C + c.
        "wf1": jnp.transpose(wf1_t.reshape(C, C, Lq), (2, 1, 0))
                  .reshape(Lq * C, C).astype(jnp.bfloat16),
        "bf1": bf1_t.reshape(1, C),
        "wf2": wf2_t.T.astype(jnp.bfloat16),                 # (C, OT), padded in wrapper
        "bf2": bf2_t.reshape(1, OT),
    }
    torch_params = dict(w1=w1_t, b1=b1_t, w2=w2_t, b2=b2_t,
                        wf1=wf1_t, bf1=bf1_t, wf2=wf2_t, bf2=bf2_t)
    return kernel_params, torch_params


def ref_forward(x, tp, output_seq_len, output_size):
    """Plain-JAX reference mirroring the PyTorch forward (NCL layout), with the
    same bf16-input / f32-accumulate matmul policy the kernel uses."""
    B = x.shape[0]
    h = jnp.transpose(x, (0, 2, 1))                          # (B, F, L)

    def conv_rep(h, w, b):
        Lc = h.shape[2]
        hp = jnp.pad(h, ((0, 0), (0, 0), (1, 1)), mode="edge")
        y = sum(jnp.einsum("bcl,oc->bol",
                           hp[:, :, k:k + Lc].astype(jnp.bfloat16),
                           w[:, :, k].astype(jnp.bfloat16),
                           preferred_element_type=jnp.float32)
                for k in range(3))
        return y + b[None, :, None]

    h = jax.nn.relu(conv_rep(h, tp["w1"], tp["b1"]))
    h = jnp.maximum(h[:, :, 0::2], h[:, :, 1::2])
    h = jax.nn.relu(conv_rep(h, tp["w2"], tp["b2"]))
    h = jnp.maximum(h[:, :, 0::2], h[:, :, 1::2])
    flat = h.reshape(B, -1)
    z = jax.nn.relu(jnp.dot(flat.astype(jnp.bfloat16),
                            tp["wf1"].T.astype(jnp.bfloat16),
                            preferred_element_type=jnp.float32) + tp["bf1"])
    out = jnp.dot(z.astype(jnp.bfloat16), tp["wf2"].T.astype(jnp.bfloat16),
                  preferred_element_type=jnp.float32) + tp["bf2"]
    return out.reshape(B, output_seq_len, output_size)


if __name__ == "__main__":
    # Small, module-consistent shapes.
    B, seq_len, n_features = 2, 16, 4
    out_channels = 32
    output_size, output_seq_len = 2, 20

    key = jax.random.PRNGKey(0)
    kx, kp = jax.random.split(key)
    x = jax.random.normal(kx, (B, seq_len, n_features), dtype=jnp.float32)

    params, torch_params = init_params(kp, n_features, seq_len, out_channels,
                                       output_size, output_seq_len)

    y = cnn1d_forecaster(x, params, output_seq_len, output_size)
    y = jax.block_until_ready(y)

    y_ref = ref_forward(x, torch_params, output_seq_len, output_size)
    assert y.shape == (B, output_seq_len, output_size)
    assert jnp.allclose(y, y_ref, rtol=5e-3, atol=5e-3), (
        f"max abs err {float(jnp.max(jnp.abs(y - y_ref)))}")

    print("KERNEL_OK")
</pallas_src>

<mosaic_0001>
module attributes {stable_mosaic.version = 11 : i64} {
  func.func @forecaster_kernel(%arg0: i32, %arg1: memref<128x12xbf16, #tpu.memory_space<vmem>>, %arg2: memref<12x32xbf16, #tpu.memory_space<vmem>>, %arg3: memref<1x32xf32, #tpu.memory_space<vmem>>, %arg4: memref<96x32xbf16, #tpu.memory_space<vmem>>, %arg5: memref<1x32xf32, #tpu.memory_space<vmem>>, %arg6: memref<128x32xbf16, #tpu.memory_space<vmem>>, %arg7: memref<1x32xf32, #tpu.memory_space<vmem>>, %arg8: memref<32x128xbf16, #tpu.memory_space<vmem>>, %arg9: memref<1x128xf32, #tpu.memory_space<vmem>>, %arg10: memref<8x128xf32, #tpu.memory_space<vmem>>, %arg11: memref<128x32xf32, #tpu.memory_space<vmem>>, %arg12: memref<64x32xf32, #tpu.memory_space<vmem>>, %arg13: memref<32x32xf32, #tpu.memory_space<vmem>>) attributes {dimension_semantics = [#tpu.dimension_semantics<parallel>], iteration_bounds = array<i64: 1>, scalar_prefetch = 0 : i64, scratch_operands = 3 : i64, tpu.core_type = #tpu.core_type<tc>, window_params = [{transform_indices = @transform_0, window_bounds = array<i64: 128, 12>}, {pipeline_mode = #tpu.pipeline_mode<synchronous>, transform_indices = @transform_1, window_bounds = array<i64: 12, 32>}, {pipeline_mode = #tpu.pipeline_mode<synchronous>, transform_indices = @transform_2, window_bounds = array<i64: 1, 32>}, {pipeline_mode = #tpu.pipeline_mode<synchronous>, transform_indices = @transform_3, window_bounds = array<i64: 96, 32>}, {pipeline_mode = #tpu.pipeline_mode<synchronous>, transform_indices = @transform_4, window_bounds = array<i64: 1, 32>}, {pipeline_mode = #tpu.pipeline_mode<synchronous>, transform_indices = @transform_5, window_bounds = array<i64: 128, 32>}, {pipeline_mode = #tpu.pipeline_mode<synchronous>, transform_indices = @transform_6, window_bounds = array<i64: 1, 32>}, {pipeline_mode = #tpu.pipeline_mode<synchronous>, transform_indices = @transform_7, window_bounds = array<i64: 32, 128>}, {pipeline_mode = #tpu.pipeline_mode<synchronous>, transform_indices = @transform_8, window_bounds = array<i64: 1, 128>}, {transform_indices = @transform_9, window_bounds = array<i64: 8, 128>}]} {
    %c0 = arith.constant 0 : index
    %c0_0 = arith.constant 0 : index
    %0 = vector.load %arg1[%c0, %c0_0] : memref<128x12xbf16, #tpu.memory_space<vmem>>, vector<128x12xbf16>
    %c0_1 = arith.constant 0 : index
    %c0_2 = arith.constant 0 : index
    %1 = vector.load %arg2[%c0_1, %c0_2] : memref<12x32xbf16, #tpu.memory_space<vmem>>, vector<12x32xbf16>
    %cst = arith.constant dense<0.000000e+00> : vector<128x32xf32>
    %2 = tpu.matmul %0, %1, %cst {dimension_numbers = #tpu.dot_dimension_numbers<[1], [0], [0], [1], [0, 0, 1, 1], [], []>} : vector<128x12xbf16>, vector<12x32xbf16>, vector<128x32xf32> -> vector<128x32xf32>
    %c0_3 = arith.constant 0 : index
    %c0_4 = arith.constant 0 : index
    %3 = vector.load %arg3[%c0_3, %c0_4] : memref<1x32xf32, #tpu.memory_space<vmem>>, vector<1x32xf32>
    %4 = vector.broadcast %3 : vector<1x32xf32> to vector<128x32xf32>
    %5 = arith.addf %2, %4 : vector<128x32xf32>
    %cst_5 = arith.constant 0.000000e+00 : f32
    %6 = vector.broadcast %cst_5 : f32 to vector<128x32xf32>
    %7 = arith.maximumf %5, %6 : vector<128x32xf32>
    %c0_6 = arith.constant 0 : index
    %c0_7 = arith.constant 0 : index
    %8 = vector.load %arg11[%c0_6, %c0_7] : memref<128x32xf32, #tpu.memory_space<vmem>>, vector<128x32xf32>
    tpu.vector_store %arg11[%c0_6, %c0_7], %7 {strides = array<i32>} : memref<128x32xf32, #tpu.memory_space<vmem>>, vector<128x32xf32>,
    %c0_8 = arith.constant 0 : index
    %c0_9 = arith.constant 0 : index
    %9 = tpu.strided_load %arg11[%c0_8, %c0_9] {strides = array<i32: 2, 1>} : memref<128x32xf32, #tpu.memory_space<vmem>>, vector<64x32xf32>
    %c1 = arith.constant 1 : index
    %c0_10 = arith.constant 0 : index
    %10 = tpu.strided_load %arg11[%c1, %c0_10] {strides = array<i32: 2, 1>} : memref<128x32xf32, #tpu.memory_space<vmem>>, vector<64x32xf32>
    %11 = arith.maximumf %9, %10 : vector<64x32xf32>
    %12 = tpu.iota {dimensions = array<i32: 0>} : vector<64x32xi32>
    %c8_i32 = arith.constant 8 : i32
    %c0_i32 = arith.constant 0 : i32
    %13 = arith.cmpi eq, %c8_i32, %c0_i32 : i32
    %c1_i32 = arith.constant 1 : i32
    %14 = arith.select %13, %c1_i32, %c8_i32 : i32
    %15 = vector.broadcast %14 : i32 to vector<64x32xi32>
    %16 = arith.remsi %12, %15 : vector<64x32xi32>
    %c0_i32_11 = arith.constant 0 : i32
    %17 = vector.broadcast %c0_i32_11 : i32 to vector<64x32xi32>
    %18 = arith.cmpi ne, %16, %17 : vector<64x32xi32>
    %c0_i32_12 = arith.constant 0 : i32
    %19 = vector.broadcast %c0_i32_12 : i32 to vector<64x32xi32>
    %20 = arith.cmpi slt, %16, %19 : vector<64x32xi32>
    %c0_i32_13 = arith.constant 0 : i32
    %21 = arith.cmpi slt, %14, %c0_i32_13 : i32
    %22 = vector.broadcast %21 : i1 to vector<64x32xi1>
    %23 = vector.broadcast %22 : vector<64x32xi1> to vector<64x32xi1>
    %24 = arith.xori %20, %23 : vector<64x32xi1>
    %25 = arith.andi %24, %18 : vector<64x32xi1>
    %26 = vector.broadcast %14 : i32 to vector<64x32xi32>
    %27 = arith.addi %16, %26 : vector<64x32xi32>
    %28 = arith.select %25, %27, %16 : vector<64x32xi1>, vector<64x32xi32>
    %29 = vector.extract_strided_slice %11 {offsets = [0, 0], sizes = [1, 32], strides = [1, 1]} : vector<64x32xf32> to vector<1x32xf32>
    %30 = vector.extract_strided_slice %11 {offsets = [0, 0], sizes = [63, 32], strides = [1, 1]} : vector<64x32xf32> to vector<63x32xf32>
    %31 = tpu.concatenate %29, %30 in 0 : vector<1x32xf32>, vector<63x32xf32> -> vector<64x32xf32>
    %c0_i32_14 = arith.constant 0 : i32
    %32 = vector.broadcast %c0_i32_14 : i32 to vector<64x32xi32>
    %33 = arith.cmpi eq, %28, %32 : vector<64x32xi32>
    %34 = arith.select %33, %11, %31 : vector<64x32xi1>, vector<64x32xf32>
    %35 = vector.extract_strided_slice %11 {offsets = [1, 0], sizes = [63, 32], strides = [1, 1]} : vector<64x32xf32> to vector<63x32xf32>
    %36 = vector.extract_strided_slice %11 {offsets = [63, 0], sizes = [1, 32], strides = [1, 1]} : vector<64x32xf32> to vector<1x32xf32>
    %37 = tpu.concatenate %35, %36 in 0 : vector<63x32xf32>, vector<1x32xf32> -> vector<64x32xf32>
    %c7_i32 = arith.constant 7 : i32
    %38 = vector.broadcast %c7_i32 : i32 to vector<64x32xi32>
    %39 = arith.cmpi eq, %28, %38 : vector<64x32xi32>
    %40 = arith.select %39, %11, %37 : vector<64x32xi1>, vector<64x32xf32>
    %41 = arith.truncf %34 : vector<64x32xf32> to vector<64x32xbf16>
    %c0_15 = arith.constant 0 : index
    %c0_16 = arith.constant 0 : index
    %42 = vector.load %arg4[%c0_15, %c0_16] : memref<96x32xbf16, #tpu.memory_space<vmem>>, vector<32x32xbf16>
    %cst_17 = arith.constant dense<0.000000e+00> : vector<64x32xf32>
    %43 = tpu.matmul %41, %42, %cst_17 {dimension_numbers = #tpu.dot_dimension_numbers<[1], [0], [0], [1], [0, 0, 1, 1], [], []>} : vector<64x32xbf16>, vector<32x32xbf16>, vector<64x32xf32> -> vector<64x32xf32>
    %44 = arith.truncf %11 : vector<64x32xf32> to vector<64x32xbf16>
    %c32 = arith.constant 32 : index
    %c0_18 = arith.constant 0 : index
    %45 = vector.load %arg4[%c32, %c0_18] : memref<96x32xbf16, #tpu.memory_space<vmem>>, vector<32x32xbf16>
    %cst_19 = arith.constant dense<0.000000e+00> : vector<64x32xf32>
    %46 = tpu.matmul %44, %45, %cst_19 {dimension_numbers = #tpu.dot_dimension_numbers<[1], [0], [0], [1], [0, 0, 1, 1], [], []>} : vector<64x32xbf16>, vector<32x32xbf16>, vector<64x32xf32> -> vector<64x32xf32>
    %47 = arith.addf %43, %46 : vector<64x32xf32>
    %48 = arith.truncf %40 : vector<64x32xf32> to vector<64x32xbf16>
    %c64 = arith.constant 64 : index
    %c0_20 = arith.constant 0 : index
    %49 = vector.load %arg4[%c64, %c0_20] : memref<96x32xbf16, #tpu.memory_space<vmem>>, vector<32x32xbf16>
    %cst_21 = arith.constant dense<0.000000e+00> : vector<64x32xf32>
    %50 = tpu.matmul %48, %49, %cst_21 {dimension_numbers = #tpu.dot_dimension_numbers<[1], [0], [0], [1], [0, 0, 1, 1], [], []>} : vector<64x32xbf16>, vector<32x32xbf16>, vector<64x32xf32> -> vector<64x32xf32>
    %51 = arith.addf %47, %50 : vector<64x32xf32>
    %c0_22 = arith.constant 0 : index
    %c0_23 = arith.constant 0 : index
    %52 = vector.load %arg5[%c0_22, %c0_23] : memref<1x32xf32, #tpu.memory_space<vmem>>, vector<1x32xf32>
    %53 = vector.broadcast %52 : vector<1x32xf32> to vector<64x32xf32>
    %54 = arith.addf %51, %53 : vector<64x32xf32>
    %cst_24 = arith.constant 0.000000e+00 : f32
    %55 = vector.broadcast %cst_24 : f32 to vector<64x32xf32>
    %56 = arith.maximumf %54, %55 : vector<64x32xf32>
    %c0_25 = arith.constant 0 : index
    %c0_26 = arith.constant 0 : index
    %57 = vector.load %arg12[%c0_25, %c0_26] : memref<64x32xf32, #tpu.memory_space<vmem>>, vector<64x32xf32>
    tpu.vector_store %arg12[%c0_25, %c0_26], %56 {strides = array<i32>} : memref<64x32xf32, #tpu.memory_space<vmem>>, vector<64x32xf32>,
    %c0_27 = arith.constant 0 : index
    %c0_28 = arith.constant 0 : index
    %58 = tpu.strided_load %arg12[%c0_27, %c0_28] {strides = array<i32: 2, 1>} : memref<64x32xf32, #tpu.memory_space<vmem>>, vector<32x32xf32>
    %c1_29 = arith.constant 1 : index
    %c0_30 = arith.constant 0 : index
    %59 = tpu.strided_load %arg12[%c1_29, %c0_30] {strides = array<i32: 2, 1>} : memref<64x32xf32, #tpu.memory_space<vmem>>, vector<32x32xf32>
    %60 = arith.maximumf %58, %59 : vector<32x32xf32>
    %c0_31 = arith.constant 0 : index
    %c0_32 = arith.constant 0 : index
    %61 = vector.load %arg13[%c0_31, %c0_32] : memref<32x32xf32, #tpu.memory_space<vmem>>, vector<32x32xf32>
    tpu.vector_store %arg13[%c0_31, %c0_32], %60 {strides = array<i32>} : memref<32x32xf32, #tpu.memory_space<vmem>>, vector<32x32xf32>,
    %cst_33 = arith.constant 0.000000e+00 : f32
    %62 = vector.broadcast %cst_33 : f32 to vector<8x32xf32>
    %c0_34 = arith.constant 0 : index
    %c0_35 = arith.constant 0 : index
    %63 = tpu.strided_load %arg13[%c0_34, %c0_35] {strides = array<i32: 4, 1>} : memref<32x32xf32, #tpu.memory_space<vmem>>, vector<8x32xf32>
    %64 = arith.truncf %63 : vector<8x32xf32> to vector<8x32xbf16>
    %c0_36 = arith.constant 0 : index
    %c0_37 = arith.constant 0 : index
    %65 = vector.load %arg6[%c0_36, %c0_37] : memref<128x32xbf16, #tpu.memory_space<vmem>>, vector<32x32xbf16>
    %cst_38 = arith.constant dense<0.000000e+00> : vector<8x32xf32>
    %66 = tpu.matmul %64, %65, %cst_38 {dimension_numbers = #tpu.dot_dimension_numbers<[1], [0], [0], [1], [0, 0, 1, 1], [], []>} : vector<8x32xbf16>, vector<32x32xbf16>, vector<8x32xf32> -> vector<8x32xf32>
    %67 = arith.addf %62, %66 : vector<8x32xf32>
    %c1_39 = arith.constant 1 : index
    %c0_40 = arith.constant 0 : index
    %68 = tpu.strided_load %arg13[%c1_39, %c0_40] {strides = array<i32: 4, 1>} : memref<32x32xf32, #tpu.memory_space<vmem>>, vector<8x32xf32>
    %69 = arith.truncf %68 : vector<8x32xf32> to vector<8x32xbf16>
    %c32_41 = arith.constant 32 : index
    %c0_42 = arith.constant 0 : index
    %70 = vector.load %arg6[%c32_41, %c0_42] : memref<128x32xbf16, #tpu.memory_space<vmem>>, vector<32x32xbf16>
    %cst_43 = arith.constant dense<0.000000e+00> : vector<8x32xf32>
    %71 = tpu.matmul %69, %70, %cst_43 {dimension_numbers = #tpu.dot_dimension_numbers<[1], [0], [0], [1], [0, 0, 1, 1], [], []>} : vector<8x32xbf16>, vector<32x32xbf16>, vector<8x32xf32> -> vector<8x32xf32>
    %72 = arith.addf %67, %71 : vector<8x32xf32>
    %c2 = arith.constant 2 : index
    %c0_44 = arith.constant 0 : index
    %73 = tpu.strided_load %arg13[%c2, %c0_44] {strides = array<i32: 4, 1>} : memref<32x32xf32, #tpu.memory_space<vmem>>, vector<8x32xf32>
    %74 = arith.truncf %73 : vector<8x32xf32> to vector<8x32xbf16>
    %c64_45 = arith.constant 64 : index
    %c0_46 = arith.constant 0 : index
    %75 = vector.load %arg6[%c64_45, %c0_46] : memref<128x32xbf16, #tpu.memory_space<vmem>>, vector<32x32xbf16>
    %cst_47 = arith.constant dense<0.000000e+00> : vector<8x32xf32>
    %76 = tpu.matmul %74, %75, %cst_47 {dimension_numbers = #tpu.dot_dimension_numbers<[1], [0], [0], [1], [0, 0, 1, 1], [], []>} : vector<8x32xbf16>, vector<32x32xbf16>, vector<8x32xf32> -> vector<8x32xf32>
    %77 = arith.addf %72, %76 : vector<8x32xf32>
    %c3 = arith.constant 3 : index
    %c0_48 = arith.constant 0 : index
    %78 = tpu.strided_load %arg13[%c3, %c0_48] {strides = array<i32: 4, 1>} : memref<32x32xf32, #tpu.memory_space<vmem>>, vector<8x32xf32>
    %79 = arith.truncf %78 : vector<8x32xf32> to vector<8x32xbf16>
    %c96 = arith.constant 96 : index
    %c0_49 = arith.constant 0 : index
    %80 = vector.load %arg6[%c96, %c0_49] : memref<128x32xbf16, #tpu.memory_space<vmem>>, vector<32x32xbf16>
    %cst_50 = arith.constant dense<0.000000e+00> : vector<8x32xf32>
    %81 = tpu.matmul %79, %80, %cst_50 {dimension_numbers = #tpu.dot_dimension_numbers<[1], [0], [0], [1], [0, 0, 1, 1], [], []>} : vector<8x32xbf16>, vector<32x32xbf16>, vector<8x32xf32> -> vector<8x32xf32>
    %82 = arith.addf %77, %81 : vector<8x32xf32>
    %c0_51 = arith.constant 0 : index
    %c0_52 = arith.constant 0 : index
    %83 = vector.load %arg7[%c0_51, %c0_52] : memref<1x32xf32, #tpu.memory_space<vmem>>, vector<1x32xf32>
    %84 = vector.broadcast %83 : vector<1x32xf32> to vector<8x32xf32>
    %85 = arith.addf %82, %84 : vector<8x32xf32>
    %cst_53 = arith.constant 0.000000e+00 : f32
    %86 = vector.broadcast %cst_53 : f32 to vector<8x32xf32>
    %87 = arith.maximumf %85, %86 : vector<8x32xf32>
    %88 = arith.truncf %87 : vector<8x32xf32> to vector<8x32xbf16>
    %c0_54 = arith.constant 0 : index
    %c0_55 = arith.constant 0 : index
    %89 = vector.load %arg8[%c0_54, %c0_55] : memref<32x128xbf16, #tpu.memory_space<vmem>>, vector<32x128xbf16>
    %cst_56 = arith.constant dense<0.000000e+00> : vector<8x128xf32>
    %90 = tpu.matmul %88, %89, %cst_56 {dimension_numbers = #tpu.dot_dimension_numbers<[1], [0], [0], [1], [0, 0, 1, 1], [], []>} : vector<8x32xbf16>, vector<32x128xbf16>, vector<8x128xf32> -> vector<8x128xf32>
    %c0_57 = arith.constant 0 : index
    %c0_58 = arith.constant 0 : index
    %91 = vector.load %arg9[%c0_57, %c0_58] : memref<1x128xf32, #tpu.memory_space<vmem>>, vector<1x128xf32>
    %92 = vector.broadcast %91 : vector<1x128xf32> to vector<8x128xf32>
    %93 = arith.addf %90, %92 : vector<8x128xf32>
    %c0_59 = arith.constant 0 : index
    %c0_60 = arith.constant 0 : index
    %94 = vector.load %arg10[%c0_59, %c0_60] : memref<8x128xf32, #tpu.memory_space<vmem>>, vector<8x128xf32>
    tpu.vector_store %arg10[%c0_59, %c0_60], %93 {strides = array<i32>} : memref<8x128xf32, #tpu.memory_space<vmem>>, vector<8x128xf32>,
    return
  }
  func.func @transform_0(%arg0: i32) -> (i32, i32) {
    %c0_i32 = arith.constant 0 : i32
    %c0_i32_0 = arith.constant 0 : i32
    return %arg0, %c0_i32 : i32, i32
  }
  func.func @transform_1(%arg0: i32) -> (i32, i32) {
    %c0_i32 = arith.constant 0 : i32
    %c0_i32_0 = arith.constant 0 : i32
    %c0_i32_1 = arith.constant 0 : i32
    return %c0_i32, %c0_i32_0 : i32, i32
  }
  func.func @transform_2(%arg0: i32) -> (i32, i32) {
    %c0_i32 = arith.constant 0 : i32
    %c0_i32_0 = arith.constant 0 : i32
    %c0_i32_1 = arith.constant 0 : i32
    return %c0_i32, %c0_i32_0 : i32, i32
  }
  func.func @transform_3(%arg0: i32) -> (i32, i32) {
    %c0_i32 = arith.constant 0 : i32
    %c0_i32_0 = arith.constant 0 : i32
    %c0_i32_1 = arith.constant 0 : i32
    return %c0_i32, %c0_i32_0 : i32, i32
  }
  func.func @transform_4(%arg0: i32) -> (i32, i32) {
    %c0_i32 = arith.constant 0 : i32
    %c0_i32_0 = arith.constant 0 : i32
    %c0_i32_1 = arith.constant 0 : i32
    return %c0_i32, %c0_i32_0 : i32, i32
  }
  func.func @transform_5(%arg0: i32) -> (i32, i32) {
    %c0_i32 = arith.constant 0 : i32
    %c0_i32_0 = arith.constant 0 : i32
    %c0_i32_1 = arith.constant 0 : i32
    return %c0_i32, %c0_i32_0 : i32, i32
  }
  func.func @transform_6(%arg0: i32) -> (i32, i32) {
    %c0_i32 = arith.constant 0 : i32
    %c0_i32_0 = arith.constant 0 : i32
    %c0_i32_1 = arith.constant 0 : i32
    return %c0_i32, %c0_i32_0 : i32, i32
  }
  func.func @transform_7(%arg0: i32) -> (i32, i32) {
    %c0_i32 = arith.constant 0 : i32
    %c0_i32_0 = arith.constant 0 : i32
    %c0_i32_1 = arith.constant 0 : i32
    return %c0_i32, %c0_i32_0 : i32, i32
  }
  func.func @transform_8(%arg0: i32) -> (i32, i32) {
    %c0_i32 = arith.constant 0 : i32
    %c0_i32_0 = arith.constant 0 : i32
    %c0_i32_1 = arith.constant 0 : i32
    return %c0_i32, %c0_i32_0 : i32, i32
  }
  func.func @transform_9(%arg0: i32) -> (i32, i32) {
    %c0_i32 = arith.constant 0 : i32
    %c0_i32_0 = arith.constant 0 : i32
    return %arg0, %c0_i32 : i32, i32
  }
}

</mosaic_0001>

<llo_original>
// kernel: tpu_custom_call.1
$region0: #{tpu_custom_call.1}
  #allocation0 [shape = 'u32[]', space=smem, size = 0x4, offset = 0x4, fixed_abs, tag = 'smem constant byte address 0x4 - core index']
  #allocation1 [shape = 'u32[144,128]{1,0:T(1,128)}', space=vmem, size = 0x12000, scoped, tag = 'internal scratch']
  #allocation2 [shape = 'f32[128,32]{1,0:T(8,128)}', space=vmem, size = 0x10000, scoped, tag = 'scratch operand']
  #allocation3 [shape = 'f32[64,32]{1,0:T(8,128)}', space=vmem, size = 0x8000, scoped, tag = 'scratch operand']
  #allocation4 [shape = 'f32[32,32]{1,0:T(8,128)}', space=vmem, size = 0x4000, scoped, tag = 'scratch operand']
  %s0 = inlined_call_operand.vmem [shape: bf16[128,12], index: 0, kind: input, shape index: {}]
  %s1 = inlined_call_operand.vmem [shape: bf16[12,32], index: 1, kind: input, shape index: {}]
  %s2 = inlined_call_operand.vmem [shape: f32[1,32], index: 2, kind: input, shape index: {}]
  %s3 = inlined_call_operand.vmem [shape: bf16[96,32], index: 3, kind: input, shape index: {}]
  %s4 = inlined_call_operand.vmem [shape: f32[1,32], index: 4, kind: input, shape index: {}]
  %s5 = inlined_call_operand.vmem [shape: bf16[128,32], index: 5, kind: input, shape index: {}]
  %s6 = inlined_call_operand.vmem [shape: f32[1,32], index: 6, kind: input, shape index: {}]
  %s7 = inlined_call_operand.vmem [shape: bf16[32,128], index: 7, kind: input, shape index: {}]
  %s8 = inlined_call_operand.vmem [shape: f32[1,128], index: 8, kind: input, shape index: {}]
  %s9 = inlined_call_operand.hbm [shape: f32[8,128], index: 9, kind: output, shape index: {}]
  %s10 = sld [smem:[#allocation0]]
  $region46: #{tpu_custom_call.1} parent=0
    _
  %s12 = ssub.s32 1, %s10
  %s13 = scalar_select 0, %s12, %s10
  $region1: #{tpu_custom_call.1} parent=0
    #allocation5 [shape = 'u8[4096]{0}', space=vmem, size = 0x1000, scoped, tag = 'output window, operand 0, single buffered']
    #allocation6 [shape = 's32[1]{0}', space=sflag, size = 0x4, scoped, tag = 'scoped memory for tpu_custom_call.1']
    %14 = vsyncpa [#allocation6], 0
    // Predicated region
    $region2: #{tpu_custom_call.1} parent=1 // pred_check
      _
    $region3: #{tpu_custom_call.1} parent=1 // pred_check_branch
      %16 = sbr.rel (0) target = $region5
    $region4: #{tpu_custom_call.1} parent=1 // pred_region
      _
    $region5: #{tpu_custom_call.1} parent=1 // pred_fallthru
      _
    // Predicated region
    $region6: #{tpu_custom_call.1} parent=1 // pred_check
      _
    $region7: #{tpu_custom_call.1} parent=1 // pred_check_branch
      %18 = sbr.rel (0) target = $region9
    $region8: #{tpu_custom_call.1} parent=1 // pred_region
      _
    $region9: #{tpu_custom_call.1} parent=1 // pred_fallthru
      _
    // Predicated region
    $region10: #{tpu_custom_call.1} parent=1 // pred_check
      _
    $region11: #{tpu_custom_call.1} parent=1 // pred_check_branch
      %20 = sbr.rel (0) target = $region13
    $region12: #{tpu_custom_call.1} parent=1 // pred_region
      _
    $region13: #{tpu_custom_call.1} parent=1 // pred_fallthru
      _
    // Predicated region
    $region14: #{tpu_custom_call.1} parent=1 // pred_check
      _
    $region15: #{tpu_custom_call.1} parent=1 // pred_check_branch
      %22 = sbr.rel (0) target = $region17
    $region16: #{tpu_custom_call.1} parent=1 // pred_region
      _
    $region17: #{tpu_custom_call.1} parent=1 // pred_fallthru
      _
    // Predicated region
    $region18: #{tpu_custom_call.1} parent=1 // pred_check
      _
    $region19: #{tpu_custom_call.1} parent=1 // pred_check_branch
      %24 = sbr.rel (0) target = $region21
    $region20: #{tpu_custom_call.1} parent=1 // pred_region
      _
    $region21: #{tpu_custom_call.1} parent=1 // pred_fallthru
      _
    // Predicated region
    $region22: #{tpu_custom_call.1} parent=1 // pred_check
      _
    $region23: #{tpu_custom_call.1} parent=1 // pred_check_branch
      %26 = sbr.rel (0) target = $region25
    $region24: #{tpu_custom_call.1} parent=1 // pred_region
      _
    $region25: #{tpu_custom_call.1} parent=1 // pred_fallthru
      _
    // Predicated region
    $region26: #{tpu_custom_call.1} parent=1 // pred_check
      _
    $region27: #{tpu_custom_call.1} parent=1 // pred_check_branch
      %28 = sbr.rel (0) target = $region29
    $region28: #{tpu_custom_call.1} parent=1 // pred_region
      _
    $region29: #{tpu_custom_call.1} parent=1 // pred_fallthru
      _
    // Predicated region
    $region30: #{tpu_custom_call.1} parent=1 // pred_check
      _
    $region31: #{tpu_custom_call.1} parent=1 // pred_check_branch
      %30 = sbr.rel (0) target = $region33
    $region32: #{tpu_custom_call.1} parent=1 // pred_region
      _
    $region33: #{tpu_custom_call.1} parent=1 // pred_fallthru
      _
    // Predicated region
    $region34: #{tpu_custom_call.1} parent=1 // pred_check
      _
    $region35: #{tpu_custom_call.1} parent=1 // pred_check_branch
      %32 = sbr.rel (0) target = $region37
    $region36: #{tpu_custom_call.1} parent=1 // pred_region
      _
    $region37: #{tpu_custom_call.1} parent=1 // pred_fallthru
      _
    %v34 = vld [vmem:[%s0] sm:$0xf]
    %v35 = vld [vmem:[%s0 + $0x4] sm:$0xf]
    %v36 = vld [vmem:[%s0 + $0x8] sm:$0xf]
    %v37 = vld [vmem:[%s0 + $0xc] sm:$0xf]
    %v38 = vld [vmem:[%s0 + $0x10] sm:$0xf]
    %v39 = vld [vmem:[%s0 + $0x14] sm:$0xf]
    %v40 = vld [vmem:[%s0 + $0x18] sm:$0xf]
    %v41 = vld [vmem:[%s0 + $0x1c] sm:$0xf]
    %v42 = vld [vmem:[%s0 + $0x20] sm:$0xf]
    %v43 = vld [vmem:[%s0 + $0x24] sm:$0xf]
    %v44 = vld [vmem:[%s0 + $0x28] sm:$0xf]
    %v45 = vld [vmem:[%s0 + $0x2c] sm:$0xf]
    %v46 = vld [vmem:[%s0 + $0x30] sm:$0xf]
    %v47 = vld [vmem:[%s0 + $0x34] sm:$0xf]
    %v48 = vld [vmem:[%s0 + $0x38] sm:$0xf]
    %v49 = vld [vmem:[%s0 + $0x3c] sm:$0xf]
    %v50 = vld [vmem:[%s1] sm:$0xf]
    %v51 = vld [vmem:[%s1 + $0x4] sm:$0x3]
    %v52 = vld [vmem:[%s2] sm:$0x1]
    %v54 = vlaneseq
    %v55 = vshrl.u32 %v54, 7
    %v56 = vsub.s32 0, %v55
    %v57 = vrot.slane %v52, %v56
    %v75 = vunpack.c.l.b16 %v34
    %v76 = vunpack.c.l.b16 %v35
    %v77 = vunpack.c.l.b16 %v36
    %v78 = vunpack.c.l.b16 %v37
    %v79 = vunpack.c.l.b16 %v38
    %v80 = vunpack.c.l.b16 %v39
    %v81 = vunpack.c.l.b16 %v40
    %v82 = vunpack.c.l.b16 %v41
    %v83 = vunpack.c.l.b16 %v42
    %v84 = vunpack.c.l.b16 %v43
    %v85 = vunpack.c.l.b16 %v44
    %v86 = vunpack.c.l.b16 %v45
    %v87 = vunpack.c.l.b16 %v46
    %v88 = vunpack.c.l.b16 %v47
    %v89 = vunpack.c.l.b16 %v48
    %v90 = vunpack.c.l.b16 %v49
    %v91 = vpack.c.b16 %v76, %v75
    %v92 = vpack.c.b16 %v78, %v77
    %v93 = vpack.c.b16 %v80, %v79
    %v94 = vpack.c.b16 %v82, %v81
    %v95 = vpack.c.b16 %v84, %v83
    %v96 = vpack.c.b16 %v86, %v85
    %v97 = vpack.c.b16 %v88, %v87
    %v98 = vpack.c.b16 %v90, %v89
    %v101 = vunpack.c.l.b16 %v50
    %v102 = vunpack.c.l.b16 %v51
    %v103 = vpack.c.b16 %v102, %v101
    %vm104 = vcmask 97280
    %v106 = vsel %vm104, %v91, 0
    %v109 = vsel %vm104, %v92, 0
    %v112 = vsel %vm104, %v93, 0
    %v115 = vsel %vm104, %v94, 0
    %v118 = vsel %vm104, %v95, 0
    %v121 = vsel %vm104, %v96, 0
    %v124 = vsel %vm104, %v97, 0
    %v127 = vsel %vm104, %v98, 0
    %vm129 = vcmask 1045504
    %v131 = vsel %vm129, %v103, 0
    %133 = vmatprep.subr.bf16.mxu0 0
    %134 = vmatpush1.bf16.msra.mxu0 %v131
    %135 = vmatprep.subr.bf16.mxu0 0
    %136 = vmatpush1.bf16.msra.mxu0 0
    %137 = vmatprep.subr.bf16.mxu0 0
    %138 = vmatpush1.bf16.msra.mxu0 0
    %139 = vmatprep.subr.bf16.mxu0 0
    %140 = vmatpush1.bf16.msra.mxu0 0
    %141 = vmatprep.subr.bf16.mxu0 0
    %142 = vmatpush1.bf16.msra.mxu0 0
    %143 = vmatprep.subr.bf16.mxu0 0
    %144 = vmatpush1.bf16.msra.mxu0 0
    %145 = vmatprep.subr.bf16.mxu0 0
    %146 = vmatpush1.bf16.msra.mxu0 0
    %147 = vmatprep.subr.bf16.mxu0 0
    %148 = vmatpush1.bf16.msra.mxu0 0
    %149 = vmatprep.subr.bf16.mxu0 0
    %150 = vmatpush1.bf16.msra.mxu0 0
    %151 = vmatprep.subr.bf16.mxu0 0
    %152 = vmatpush1.bf16.msra.mxu0 0
    %153 = vmatprep.subr.bf16.mxu0 0
    %154 = vmatpush1.bf16.msra.mxu0 0
    %155 = vmatprep.subr.bf16.mxu0 0
    %156 = vmatpush1.bf16.msra.mxu0 0
    %157 = vmatprep.subr.bf16.mxu0 0
    %158 = vmatpush1.bf16.msra.mxu0 0
    %159 = vmatprep.subr.bf16.mxu0 0
    %160 = vmatpush1.bf16.msra.mxu0 0
    %161 = vmatprep.subr.bf16.mxu0 0
    %162 = vmatpush1.bf16.msra.mxu0 0
    %163 = vmatprep.subr.bf16.mxu0 0
    %164 = vmatpush1.bf16.msra.mxu0 0
    %165 = vmatprep.mubr.bf16.mxu0 0
    %166 = vmatmul.mubr.bf16.gmra.mrb[0].mxu0 %v106
    %v167 = vpop.f32.mrb[0].mxu0
    %v168 = vadd.f32 %v57, %v167
    %v169 = vpop.f32.mrb[0].mxu0
    %v170 = vpop.f32.mrb[0].mxu0
    %v171 = vadd.f32 %v57, %v170
    %v172 = vpop.f32.mrb[0].mxu0
    %173 = vmatprep.mubr.bf16.mxu0 0
    %174 = vmatmul.mubr.bf16.gmra.mrb[0].mxu0 %v109
    %v175 = vpop.f32.mrb[0].mxu0
    %v176 = vadd.f32 %v57, %v175
    %v177 = vpop.f32.mrb[0].mxu0
    %v178 = vpop.f32.mrb[0].mxu0
    %v179 = vadd.f32 %v57, %v178
    %v180 = vpop.f32.mrb[0].mxu0
    %181 = vmatprep.mubr.bf16.mxu0 0
    %182 = vmatmul.mubr.bf16.gmra.mrb[0].mxu0 %v112
    %v183 = vpop.f32.mrb[0].mxu0
    %v184 = vadd.f32 %v57, %v183
    %v185 = vpop.f32.mrb[0].mxu0
    %v186 = vpop.f32.mrb[0].mxu0
    %v187 = vadd.f32 %v57, %v186
    %v188 = vpop.f32.mrb[0].mxu0
    %189 = vmatprep.mubr.bf16.mxu0 0
    %190 = vmatmul.mubr.bf16.gmra.mrb[0].mxu0 %v115
    %v191 = vpop.f32.mrb[0].mxu0
    %v192 = vadd.f32 %v57, %v191
    %v193 = vpop.f32.mrb[0].mxu0
    %v194 = vpop.f32.mrb[0].mxu0
    %v195 = vadd.f32 %v57, %v194
    %v196 = vpop.f32.mrb[0].mxu0
    %197 = vmatprep.mubr.bf16.mxu0 0
    %198 = vmatmul.mubr.bf16.gmra.mrb[0].mxu0 %v118
    %v199 = vpop.f32.mrb[0].mxu0
    %v200 = vadd.f32 %v57, %v199
    %v201 = vpop.f32.mrb[0].mxu0
    %v202 = vpop.f32.mrb[0].mxu0
    %v203 = vadd.f32 %v57, %v202
    %v204 = vpop.f32.mrb[0].mxu0
    %205 = vmatprep.mubr.bf16.mxu0 0
    %206 = vmatmul.mubr.bf16.gmra.mrb[0].mxu0 %v121
    %v207 = vpop.f32.mrb[0].mxu0
    %v208 = vadd.f32 %v57, %v207
    %v209 = vpop.f32.mrb[0].mxu0
    %v210 = vpop.f32.mrb[0].mxu0
    %v211 = vadd.f32 %v57, %v210
    %v212 = vpop.f32.mrb[0].mxu0
    %213 = vmatprep.mubr.bf16.mxu0 0
    %214 = vmatmul.mubr.bf16.gmra.mrb[0].mxu0 %v124
    %v215 = vpop.f32.mrb[0].mxu0
    %v216 = vadd.f32 %v57, %v215
    %v217 = vpop.f32.mrb[0].mxu0
    %v218 = vpop.f32.mrb[0].mxu0
    %v219 = vadd.f32 %v57, %v218
    %v220 = vpop.f32.mrb[0].mxu0
    %221 = vmatprep.mubr.bf16.mxu0 0
    %222 = vmatmul.mubr.bf16.gmra.mrb[0].mxu0 %v127
    %v223 = vpop.f32.mrb[0].mxu0
    %v224 = vadd.f32 %v57, %v223
    %v225 = vpop.f32.mrb[0].mxu0
    %v226 = vpop.f32.mrb[0].mxu0
    %v227 = vadd.f32 %v57, %v226
    %v228 = vpop.f32.mrb[0].mxu0
    %229 = vdwg.mxu0
    %v230 = vmax.f32 %v168, 0.0
    %v231 = vmax.f32 %v171, 0.0
    %v232 = vmax.f32 %v176, 0.0
    %v233 = vmax.f32 %v179, 0.0
    %v234 = vmax.f32 %v184, 0.0
    %v235 = vmax.f32 %v187, 0.0
    %v236 = vmax.f32 %v192, 0.0
    %v237 = vmax.f32 %v195, 0.0
    %v238 = vmax.f32 %v200, 0.0
    %v239 = vmax.f32 %v203, 0.0
    %v240 = vmax.f32 %v208, 0.0
    %v241 = vmax.f32 %v211, 0.0
    %v242 = vmax.f32 %v216, 0.0
    %v243 = vmax.f32 %v219, 0.0
    %v244 = vmax.f32 %v224, 0.0
    %v245 = vmax.f32 %v227, 0.0
    %vm246 = vcmask 261120
    %247 = vst.msk [vmem:[#allocation2] sm:$0xff] %vm246, %v230
    %248 = vst.msk [vmem:[#allocation2 + $0x8] sm:$0xff] %vm246, %v231
    %249 = vst.msk [vmem:[#allocation2 + $0x10] sm:$0xff] %vm246, %v232
    %250 = vst.msk [vmem:[#allocation2 + $0x18] sm:$0xff] %vm246, %v233
    %251 = vst.msk [vmem:[#allocation2 + $0x20] sm:$0xff] %vm246, %v234
    %252 = vst.msk [vmem:[#allocation2 + $0x28] sm:$0xff] %vm246, %v235
    %253 = vst.msk [vmem:[#allocation2 + $0x30] sm:$0xff] %vm246, %v236
    %254 = vst.msk [vmem:[#allocation2 + $0x38] sm:$0xff] %vm246, %v237
    %255 = vst.msk [vmem:[#allocation2 + $0x40] sm:$0xff] %vm246, %v238
    %256 = vst.msk [vmem:[#allocation2 + $0x48] sm:$0xff] %vm246, %v239
    %257 = vst.msk [vmem:[#allocation2 + $0x50] sm:$0xff] %vm246, %v240
    %258 = vst.msk [vmem:[#allocation2 + $0x58] sm:$0xff] %vm246, %v241
    %259 = vst.msk [vmem:[#allocation2 + $0x60] sm:$0xff] %vm246, %v242
    %260 = vst.msk [vmem:[#allocation2 + $0x68] sm:$0xff] %vm246, %v243
    %261 = vst.msk [vmem:[#allocation2 + $0x70] sm:$0xff] %vm246, %v244
    %262 = vst.msk [vmem:[#allocation2 + $0x78] sm:$0xff] %vm246, %v245
    %v263 = vld [vmem:[#allocation2] ss:$2 sm:$0xff]
    %s264 = scalar_lea.vmem [#allocation2], 16
    %v265 = vld [vmem:[%s264] ss:$2 sm:$0xff]
    %s266 = scalar_lea.vmem [#allocation2], 32
    %v267 = vld [vmem:[%s266] ss:$2 sm:$0xff]
    %s268 = scalar_lea.vmem [#allocation2], 48
    %v269 = vld [vmem:[%s268] ss:$2 sm:$0xff]
    %s270 = scalar_lea.vmem [#allocation2], 64
    %v271 = vld [vmem:[%s270] ss:$2 sm:$0xff]
    %s272 = scalar_lea.vmem [#allocation2], 80
    %v273 = vld [vmem:[%s272] ss:$2 sm:$0xff]
    %s274 = scalar_lea.vmem [#allocation2], 96
    %v275 = vld [vmem:[%s274] ss:$2 sm:$0xff]
    %s276 = scalar_lea.vmem [#allocation2], 112
    %v277 = vld [vmem:[%s276] ss:$2 sm:$0xff]
    %s278 = scalar_lea.vmem [#allocation2], 1
    %v279 = vld [vmem:[%s278] ss:$2 sm:$0xff]
    %s280 = scalar_lea.vmem [#allocation2], 17
    %v281 = vld [vmem:[%s280] ss:$2 sm:$0xff]
    %s282 = scalar_lea.vmem [#allocation2], 33
    %v283 = vld [vmem:[%s282] ss:$2 sm:$0xff]
    %s284 = scalar_lea.vmem [#allocation2], 49
    %v285 = vld [vmem:[%s284] ss:$2 sm:$0xff]
    %s286 = scalar_lea.vmem [#allocation2], 65
    %v287 = vld [vmem:[%s286] ss:$2 sm:$0xff]
    %s288 = scalar_lea.vmem [#allocation2], 81
    %v289 = vld [vmem:[%s288] ss:$2 sm:$0xff]
    %s290 = scalar_lea.vmem [#allocation2], 97
    %v291 = vld [vmem:[%s290] ss:$2 sm:$0xff]
    %s292 = scalar_lea.vmem [#allocation2], 113
    %v293 = vld [vmem:[%s292] ss:$2 sm:$0xff]
    %v294 = vmax.f32 %v263, %v279
    %v295 = vmax.f32 %v265, %v281
    %v296 = vmax.f32 %v267, %v283
    %v297 = vmax.f32 %v269, %v285
    %v298 = vmax.f32 %v271, %v287
    %v299 = vmax.f32 %v273, %v289
    %v300 = vmax.f32 %v275, %v291
    %v301 = vmax.f32 %v277, %v293
    %v302 = vlaneseq
    %v303 = vshrl.u32 %v302, 7
    %v304 = vadd.s32 %v303, 8
    %v305 = vadd.s32 %v303, 16
    %v306 = vadd.s32 %v303, 24
    %v307 = vadd.s32 %v303, 32
    %v308 = vadd.s32 %v303, 40
    %v309 = vadd.s32 %v303, 48
    %v310 = vadd.s32 %v303, 56
    %vm311 = vcmp.lt.s32.totalorder %v303, 0
    %v312 = vsub.s32 0, %v303
    %v313 = vsel %vm311, %v312, %v303
    %v314 = vshrl.u32 %v313, 3
    %v315 = vand.u32 %v313, 7
    %v316 = vsub.s32 0, %v315
    %v317 = vsel %vm311, %v316, %v315
    %vm318 = vcmp.lt.s32.totalorder %v304, 0
    %v319 = vsub.s32 0, %v304
    %v320 = vsel %vm318, %v319, %v304
    %v321 = vshrl.u32 %v320, 3
    %v322 = vand.u32 %v320, 7
    %v323 = vsub.s32 0, %v322
    %v324 = vsel %vm318, %v323, %v322
    %vm325 = vcmp.lt.s32.totalorder %v305, 0
    %v326 = vsub.s32 0, %v305
    %v327 = vsel %vm325, %v326, %v305
    %v328 = vshrl.u32 %v327, 3
    %v329 = vand.u32 %v327, 7
    %v330 = vsub.s32 0, %v329
    %v331 = vsel %vm325, %v330, %v329
    %vm332 = vcmp.lt.s32.totalorder %v306, 0
    %v333 = vsub.s32 0, %v306
    %v334 = vsel %vm332, %v333, %v306
    %v335 = vshrl.u32 %v334, 3
    %v336 = vand.u32 %v334, 7
    %v337 = vsub.s32 0, %v336
    %v338 = vsel %vm332, %v337, %v336
    %vm339 = vcmp.lt.s32.totalorder %v307, 0
    %v340 = vsub.s32 0, %v307
    %v341 = vsel %vm339, %v340, %v307
    %v342 = vshrl.u32 %v341, 3
    %v343 = vand.u32 %v341, 7
    %v344 = vsub.s32 0, %v343
    %v345 = vsel %vm339, %v344, %v343
    %vm346 = vcmp.lt.s32.totalorder %v308, 0
    %v347 = vsub.s32 0, %v308
    %v348 = vsel %vm346, %v347, %v308
    %v349 = vshrl.u32 %v348, 3
    %v350 = vand.u32 %v348, 7
    %v351 = vsub.s32 0, %v350
    %v352 = vsel %vm346, %v351, %v350
    %vm353 = vcmp.lt.s32.totalorder %v309, 0
    %v354 = vsub.s32 0, %v309
    %v355 = vsel %vm353, %v354, %v309
    %v356 = vshrl.u32 %v355, 3
    %v357 = vand.u32 %v355, 7
    %v358 = vsub.s32 0, %v357
    %v359 = vsel %vm353, %v358, %v357
    %vm360 = vcmp.lt.s32.totalorder %v310, 0
    %v361 = vsub.s32 0, %v310
    %v362 = vsel %vm360, %v361, %v310
    %v363 = vshrl.u32 %v362, 3
    %v364 = vand.u32 %v362, 7
    %v365 = vsub.s32 0, %v364
    %v366 = vsel %vm360, %v365, %v364
    %vm367 = vcmp.ne.s32.totalorder %v317, 0
    %vm368 = vcmp.ne.s32.totalorder %v324, 0
    %vm369 = vcmp.ne.s32.totalorder %v331, 0
    %vm370 = vcmp.ne.s32.totalorder %v338, 0
    %vm371 = vcmp.ne.s32.totalorder %v345, 0
    %vm372 = vcmp.ne.s32.totalorder %v352, 0
    %vm373 = vcmp.ne.s32.totalorder %v359, 0
    %vm374 = vcmp.ne.s32.totalorder %v366, 0
    %vm375 = vcmp.lt.s32.totalorder %v317, 0
    %vm376 = vcmp.lt.s32.totalorder %v324, 0
    %vm377 = vcmp.lt.s32.totalorder %v331, 0
    %vm378 = vcmp.lt.s32.totalorder %v338, 0
    %vm379 = vcmp.lt.s32.totalorder %v345, 0
    %vm380 = vcmp.lt.s32.totalorder %v352, 0
    %vm381 = vcmp.lt.s32.totalorder %v359, 0
    %vm382 = vcmp.lt.s32.totalorder %v366, 0
    %vm383 = vmand %vm375, %vm367
    %vm384 = vmand %vm376, %vm368
    %vm385 = vmand %vm377, %vm369
    %vm386 = vmand %vm378, %vm370
    %vm387 = vmand %vm379, %vm371
    %vm388 = vmand %vm380, %vm372
    %vm389 = vmand %vm381, %vm373
    %vm390 = vmand %vm382, %vm374
    %v391 = vadd.s32 %v317, 8
    %v392 = vadd.s32 %v324, 8
    %v393 = vadd.s32 %v331, 8
    %v394 = vadd.s32 %v338, 8
    %v395 = vadd.s32 %v345, 8
    %v396 = vadd.s32 %v352, 8
    %v397 = vadd.s32 %v359, 8
    %v398 = vadd.s32 %v366, 8
    %v399 = vsel %vm383, %v391, %v317
    %v400 = vsel %vm384, %v392, %v324
    %v401 = vsel %vm385, %v393, %v331
    %v402 = vsel %vm386, %v394, %v338
    %v403 = vsel %vm387, %v395, %v345
    %v404 = vsel %vm388, %v396, %v352
    %v405 = vsel %vm389, %v397, %v359
    %v406 = vsel %vm390, %v398, %v366
    %vm415 = vcmask 1040384
    %v416 = vrot.slane %v294, 7
    %v417 = vrot.slane %v295, 7
    %v418 = vsel %vm415, %v416, %v417
    %v419 = vrot.slane %v296, 7
    %v420 = vsel %vm415, %v417, %v419
    %v421 = vrot.slane %v297, 7
    %v422 = vsel %vm415, %v419, %v421
    %v423 = vrot.slane %v298, 7
    %v424 = vsel %vm415, %v421, %v423
    %v425 = vrot.slane %v299, 7
    %v426 = vsel %vm415, %v423, %v425
    %v427 = vrot.slane %v300, 7
    %v428 = vsel %vm415, %v425, %v427
    %v429 = vrot.slane %v301, 7
    %v430 = vsel %vm415, %v427, %v429
    %v439 = vsel %vm415, %v294, %v416
    %vm440 = vcmp.eq.s32.totalorder %v399, 0
    %vm441 = vcmp.eq.s32.totalorder %v400, 0
    %vm442 = vcmp.eq.s32.totalorder %v401, 0
    %vm443 = vcmp.eq.s32.totalorder %v402, 0
    %vm444 = vcmp.eq.s32.totalorder %v403, 0
    %vm445 = vcmp.eq.s32.totalorder %v404, 0
    %vm446 = vcmp.eq.s32.totalorder %v405, 0
    %vm447 = vcmp.eq.s32.totalorder %v406, 0
    %v448 = vsel %vm440, %v294, %v439
    %v449 = vsel %vm441, %v295, %v418
    %v450 = vsel %vm442, %v296, %v420
    %v451 = vsel %vm443, %v297, %v422
    %v452 = vsel %vm444, %v298, %v424
    %v453 = vsel %vm445, %v299, %v426
    %v454 = vsel %vm446, %v300, %v428
    %v455 = vsel %vm447, %v301, %v430
    %vm456 = vcmask 1046528
    %v457 = vrot.slane %v294, 1
    %v458 = vrot.slane %v295, 1
    %v459 = vsel %vm456, %v457, %v458
    %v460 = vrot.slane %v296, 1
    %v461 = vsel %vm456, %v458, %v460
    %v462 = vrot.slane %v297, 1
    %v463 = vsel %vm456, %v460, %v462
    %v464 = vrot.slane %v298, 1
    %v465 = vsel %vm456, %v462, %v464
    %v466 = vrot.slane %v299, 1
    %v467 = vsel %vm456, %v464, %v466
    %v468 = vrot.slane %v300, 1
    %v469 = vsel %vm456, %v466, %v468
    %v470 = vrot.slane %v301, 1
    %v471 = vsel %vm456, %v468, %v470
    %v480 = vsel %vm456, %v470, %v301
    %vm481 = vcmp.eq.s32.totalorder %v399, 7
    %vm482 = vcmp.eq.s32.totalorder %v400, 7
    %vm483 = vcmp.eq.s32.totalorder %v401, 7
    %vm484 = vcmp.eq.s32.totalorder %v402, 7
    %vm485 = vcmp.eq.s32.totalorder %v403, 7
    %vm486 = vcmp.eq.s32.totalorder %v404, 7
    %vm487 = vcmp.eq.s32.totalorder %v405, 7
    %vm488 = vcmp.eq.s32.totalorder %v406, 7
    %v489 = vsel %vm481, %v294, %v459
    %v490 = vsel %vm482, %v295, %v461
    %v491 = vsel %vm483, %v296, %v463
    %v492 = vsel %vm484, %v297, %v465
    %v493 = vsel %vm485, %v298, %v467
    %v494 = vsel %vm486, %v299, %v469
    %v495 = vsel %vm487, %v300, %v471
    %v496 = vsel %vm488, %v301, %v480
    %v497 = vpack.c.bf16 %v449, %v448
    %v498 = vpack.c.bf16 %v451, %v450
    %v499 = vpack.c.bf16 %v453, %v452
    %v500 = vpack.c.bf16 %v455, %v454
    %v501 = vld [vmem:[%s3] sm:$0xf]
    %v502 = vld [vmem:[%s3 + $0x4] sm:$0xf]
    %v503 = vld [vmem:[%s3 + $0x8] sm:$0xf]
    %v504 = vld [vmem:[%s3 + $0xc] sm:$0xf]
    %v505 = vpack.c.bf16 %v295, %v294
    %v506 = vpack.c.bf16 %v297, %v296
    %v507 = vpack.c.bf16 %v299, %v298
    %v508 = vpack.c.bf16 %v301, %v300
    %v509 = vld [vmem:[%s3 + $0x10] sm:$0xf]
    %v510 = vld [vmem:[%s3 + $0x14] sm:$0xf]
    %v511 = vld [vmem:[%s3 + $0x18] sm:$0xf]
    %v512 = vld [vmem:[%s3 + $0x1c] sm:$0xf]
    %v517 = vunpack.c.l.b16 %v509
    %v518 = vunpack.c.l.b16 %v510
    %v519 = vunpack.c.l.b16 %v511
    %v520 = vunpack.c.l.b16 %v512
    %v521 = vpack.c.b16 %v518, %v517
    %v522 = vpack.c.b16 %v520, %v519
    %v526 = vsel %vm246, %v505, 0
    %v529 = vsel %vm246, %v506, 0
    %v532 = vsel %vm246, %v507, 0
    %v535 = vsel %vm246, %v508, 0
    %537 = vmatprep.subr.bf16.mxu0 0
    %538 = vmatpush1.bf16.msra.mxu0 %v521
    %539 = vmatprep.subr.bf16.mxu0 0
    %540 = vmatpush1.bf16.msra.mxu0 %v522
    %541 = vmatprep.subr.bf16.mxu0 0
    %542 = vmatpush1.bf16.msra.mxu0 0
    %543 = vmatprep.subr.bf16.mxu0 0
    %544 = vmatpush1.bf16.msra.mxu0 0
    %545 = vmatprep.subr.bf16.mxu0 0
    %546 = vmatpush1.bf16.msra.mxu0 0
    %547 = vmatprep.subr.bf16.mxu0 0
    %548 = vmatpush1.bf16.msra.mxu0 0
    %549 = vmatprep.subr.bf16.mxu0 0
    %550 = vmatpush1.bf16.msra.mxu0 0
    %551 = vmatprep.subr.bf16.mxu0 0
    %552 = vmatpush1.bf16.msra.mxu0 0
    %553 = vmatprep.subr.bf16.mxu0 0
    %554 = vmatpush1.bf16.msra.mxu0 0
    %555 = vmatprep.subr.bf16.mxu0 0
    %556 = vmatpush1.bf16.msra.mxu0 0
    %557 = vmatprep.subr.bf16.mxu0 0
    %558 = vmatpush1.bf16.msra.mxu0 0
    %559 = vmatprep.subr.bf16.mxu0 0
    %560 = vmatpush1.bf16.msra.mxu0 0
    %561 = vmatprep.subr.bf16.mxu0 0
    %562 = vmatpush1.bf16.msra.mxu0 0
    %563 = vmatprep.subr.bf16.mxu0 0
    %564 = vmatpush1.bf16.msra.mxu0 0
    %565 = vmatprep.subr.bf16.mxu0 0
    %566 = vmatpush1.bf16.msra.mxu0 0
    %567 = vmatprep.subr.bf16.mxu0 0
    %568 = vmatpush1.bf16.msra.mxu0 0
    %569 = vmatprep.mubr.bf16.mxu0 0
    %570 = vmatmul.mubr.bf16.gmra.mrb[0].mxu0 %v526
    %v571 = vpop.f32.mrb[0].mxu0
    %v572 = vadd.f32 0.0, %v571
    %v573 = vpop.f32.mrb[0].mxu0
    %v574 = vpop.f32.mrb[0].mxu0
    %v575 = vadd.f32 0.0, %v574
    %v576 = vpop.f32.mrb[0].mxu0
    %577 = vmatprep.mubr.bf16.mxu0 0
    %578 = vmatmul.mubr.bf16.gmra.mrb[0].mxu0 %v529
    %v579 = vpop.f32.mrb[0].mxu0
    %v580 = vadd.f32 0.0, %v579
    %v581 = vpop.f32.mrb[0].mxu0
    %v582 = vpop.f32.mrb[0].mxu0
    %v583 = vadd.f32 0.0, %v582
    %v584 = vpop.f32.mrb[0].mxu0
    %585 = vmatprep.mubr.bf16.mxu0 0
    %586 = vmatmul.mubr.bf16.gmra.mrb[0].mxu0 %v532
    %v587 = vpop.f32.mrb[0].mxu0
    %v588 = vadd.f32 0.0, %v587
    %v589 = vpop.f32.mrb[0].mxu0
    %v590 = vpop.f32.mrb[0].mxu0
    %v591 = vadd.f32 0.0, %v590
    %v592 = vpop.f32.mrb[0].mxu0
    %593 = vmatprep.mubr.bf16.mxu0 0
    %594 = vmatmul.mubr.bf16.gmra.mrb[0].mxu0 %v535
    %v595 = vpop.f32.mrb[0].mxu0
    %v596 = vadd.f32 0.0, %v595
    %v597 = vpop.f32.mrb[0].mxu0
    %v598 = vpop.f32.mrb[0].mxu0
    %v599 = vadd.f32 0.0, %v598
    %v600 = vpop.f32.mrb[0].mxu0
    %601 = vdwg.mxu0
    %v606 = vunpack.c.l.b16 %v501
    %v607 = vunpack.c.l.b16 %v502
    %v608 = vunpack.c.l.b16 %v503
    %v609 = vunpack.c.l.b16 %v504
    %v610 = vpack.c.b16 %v607, %v606
    %v611 = vpack.c.b16 %v609, %v608
    %v615 = vsel %vm246, %v497, 0
    %v618 = vsel %vm246, %v498, 0
    %v621 = vsel %vm246, %v499, 0
    %v624 = vsel %vm246, %v500, 0
    %626 = vmatprep.subr.bf16.mxu0 0
    %627 = vmatpush1.bf16.msra.mxu0 %v610
    %628 = vmatprep.subr.bf16.mxu0 0
    %629 = vmatpush1.bf16.msra.mxu0 %v611
    %630 = vmatprep.subr.bf16.mxu0 0
    %631 = vmatpush1.bf16.msra.mxu0 0
    %632 = vmatprep.subr.bf16.mxu0 0
    %633 = vmatpush1.bf16.msra.mxu0 0
    %634 = vmatprep.subr.bf16.mxu0 0
    %635 = vmatpush1.bf16.msra.mxu0 0
    %636 = vmatprep.subr.bf16.mxu0 0
    %637 = vmatpush1.bf16.msra.mxu0 0
    %638 = vmatprep.subr.bf16.mxu0 0
    %639 = vmatpush1.bf16.msra.mxu0 0
    %640 = vmatprep.subr.bf16.mxu0 0
    %641 = vmatpush1.bf16.msra.mxu0 0
    %642 = vmatprep.subr.bf16.mxu0 0
    %643 = vmatpush1.bf16.msra.mxu0 0
    %644 = vmatprep.subr.bf16.mxu0 0
    %645 = vmatpush1.bf16.msra.mxu0 0
    %646 = vmatprep.subr.bf16.mxu0 0
    %647 = vmatpush1.bf16.msra.mxu0 0
    %648 = vmatprep.subr.bf16.mxu0 0
    %649 = vmatpush1.bf16.msra.mxu0 0
    %650 = vmatprep.subr.bf16.mxu0 0
    %651 = vmatpush1.bf16.msra.mxu0 0
    %652 = vmatprep.subr.bf16.mxu0 0
    %653 = vmatpush1.bf16.msra.mxu0 0
    %654 = vmatprep.subr.bf16.mxu0 0
    %655 = vmatpush1.bf16.msra.mxu0 0
    %656 = vmatprep.subr.bf16.mxu0 0
    %657 = vmatpush1.bf16.msra.mxu0 0
    %658 = vmatprep.mubr.bf16.mxu0 0
    %659 = vmatmul.mubr.bf16.gmra.mrb[0].mxu0 %v615
    %v660 = vpop.f32.mrb[0].mxu0
    %v661 = vadd.f32 %v572, %v660
    %v662 = vpop.f32.mrb[0].mxu0
    %v663 = vpop.f32.mrb[0].mxu0
    %v664 = vadd.f32 %v575, %v663
    %v665 = vpop.f32.mrb[0].mxu0
    %666 = vmatprep.mubr.bf16.mxu0 0
    %667 = vmatmul.mubr.bf16.gmra.mrb[0].mxu0 %v618
    %v668 = vpop.f32.mrb[0].mxu0
    %v669 = vadd.f32 %v580, %v668
    %v670 = vpop.f32.mrb[0].mxu0
    %v671 = vpop.f32.mrb[0].mxu0
    %v672 = vadd.f32 %v583, %v671
    %v673 = vpop.f32.mrb[0].mxu0
    %674 = vmatprep.mubr.bf16.mxu0 0
    %675 = vmatmul.mubr.bf16.gmra.mrb[0].mxu0 %v621
    %v676 = vpop.f32.mrb[0].mxu0
    %v677 = vadd.f32 %v588, %v676
    %v678 = vpop.f32.mrb[0].mxu0
    %v679 = vpop.f32.mrb[0].mxu0
    %v680 = vadd.f32 %v591, %v679
    %v681 = vpop.f32.mrb[0].mxu0
    %682 = vmatprep.mubr.bf16.mxu0 0
    %683 = vmatmul.mubr.bf16.gmra.mrb[0].mxu0 %v624
    %v684 = vpop.f32.mrb[0].mxu0
    %v685 = vadd.f32 %v596, %v684
    %v686 = vpop.f32.mrb[0].mxu0
    %v687 = vpop.f32.mrb[0].mxu0
    %v688 = vadd.f32 %v599, %v687
    %v689 = vpop.f32.mrb[0].mxu0
    %690 = vdwg.mxu0
    %v691 = vpack.c.bf16 %v490, %v489
    %v692 = vpack.c.bf16 %v492, %v491
    %v693 = vpack.c.bf16 %v494, %v493
    %v694 = vpack.c.bf16 %v496, %v495
    %v695 = vld [vmem:[%s3 + $0x20] sm:$0xf]
    %v696 = vld [vmem:[%s3 + $0x24] sm:$0xf]
    %v697 = vld [vmem:[%s3 + $0x28] sm:$0xf]
    %v698 = vld [vmem:[%s3 + $0x2c] sm:$0xf]
    %v703 = vunpack.c.l.b16 %v695
    %v704 = vunpack.c.l.b16 %v696
    %v705 = vunpack.c.l.b16 %v697
    %v706 = vunpack.c.l.b16 %v698
    %v707 = vpack.c.b16 %v704, %v703
    %v708 = vpack.c.b16 %v706, %v705
    %v712 = vsel %vm246, %v691, 0
    %v715 = vsel %vm246, %v692, 0
    %v718 = vsel %vm246, %v693, 0
    %v721 = vsel %vm246, %v694, 0
    %723 = vmatprep.subr.bf16.mxu0 0
    %724 = vmatpush1.bf16.msra.mxu0 %v707
    %725 = vmatprep.subr.bf16.mxu0 0
    %726 = vmatpush1.bf16.msra.mxu0 %v708
    %727 = vmatprep.subr.bf16.mxu0 0
    %728 = vmatpush1.bf16.msra.mxu0 0
    %729 = vmatprep.subr.bf16.mxu0 0
    %730 = vmatpush1.bf16.msra.mxu0 0
    %731 = vmatprep.subr.bf16.mxu0 0
    %732 = vmatpush1.bf16.msra.mxu0 0
    %733 = vmatprep.subr.bf16.mxu0 0
    %734 = vmatpush1.bf16.msra.mxu0 0
    %735 = vmatprep.subr.bf16.mxu0 0
    %736 = vmatpush1.bf16.msra.mxu0 0
    %737 = vmatprep.subr.bf16.mxu0 0
    %738 = vmatpush1.bf16.msra.mxu0 0
    %739 = vmatprep.subr.bf16.mxu0 0
    %740 = vmatpush1.bf16.msra.mxu0 0
    %741 = vmatprep.subr.bf16.mxu0 0
    %742 = vmatpush1.bf16.msra.mxu0 0
    %743 = vmatprep.subr.bf16.mxu0 0
    %744 = vmatpush1.bf16.msra.mxu0 0
    %745 = vmatprep.subr.bf16.mxu0 0
    %746 = vmatpush1.bf16.msra.mxu0 0
    %747 = vmatprep.subr.bf16.mxu0 0
    %748 = vmatpush1.bf16.msra.mxu0 0
    %749 = vmatprep.subr.bf16.mxu0 0
    %750 = vmatpush1.bf16.msra.mxu0 0
    %751 = vmatprep.subr.bf16.mxu0 0
    %752 = vmatpush1.bf16.msra.mxu0 0
    %753 = vmatprep.subr.bf16.mxu0 0
    %754 = vmatpush1.bf16.msra.mxu0 0
    %755 = vmatprep.mubr.bf16.mxu0 0
    %756 = vmatmul.mubr.bf16.gmra.mrb[0].mxu0 %v712
    %v757 = vpop.f32.mrb[0].mxu0
    %v758 = vadd.f32 0.0, %v757
    %v759 = vpop.f32.mrb[0].mxu0
    %v760 = vpop.f32.mrb[0].mxu0
    %v761 = vadd.f32 0.0, %v760
    %v762 = vpop.f32.mrb[0].mxu0
    %763 = vmatprep.mubr.bf16.mxu0 0
    %764 = vmatmul.mubr.bf16.gmra.mrb[0].mxu0 %v715
    %v765 = vpop.f32.mrb[0].mxu0
    %v766 = vadd.f32 0.0, %v765
    %v767 = vpop.f32.mrb[0].mxu0
    %v768 = vpop.f32.mrb[0].mxu0
    %v769 = vadd.f32 0.0, %v768
    %v770 = vpop.f32.mrb[0].mxu0
    %771 = vmatprep.mubr.bf16.mxu0 0
    %772 = vmatmul.mubr.bf16.gmra.mrb[0].mxu0 %v718
    %v773 = vpop.f32.mrb[0].mxu0
    %v774 = vadd.f32 0.0, %v773
    %v775 = vpop.f32.mrb[0].mxu0
    %v776 = vpop.f32.mrb[0].mxu0
    %v777 = vadd.f32 0.0, %v776
    %v778 = vpop.f32.mrb[0].mxu0
    %779 = vmatprep.mubr.bf16.mxu0 0
    %780 = vmatmul.mubr.bf16.gmra.mrb[0].mxu0 %v721
    %v781 = vpop.f32.mrb[0].mxu0
    %v782 = vadd.f32 0.0, %v781
    %v783 = vpop.f32.mrb[0].mxu0
    %v784 = vpop.f32.mrb[0].mxu0
    %v785 = vadd.f32 0.0, %v784
    %v786 = vpop.f32.mrb[0].mxu0
    %787 = vdwg.mxu0
    %v788 = vadd.f32 %v661, %v758
    %v789 = vadd.f32 %v664, %v761
    %v790 = vadd.f32 %v669, %v766
    %v791 = vadd.f32 %v672, %v769
    %v792 = vadd.f32 %v677, %v774
    %v793 = vadd.f32 %v680, %v777
    %v794 = vadd.f32 %v685, %v782
    %v795 = vadd.f32 %v688, %v785
    %v796 = vld [vmem:[%s4] sm:$0x1]
    %v798 = vlaneseq
    %v799 = vshrl.u32 %v798, 7
    %v800 = vsub.s32 0, %v799
    %v801 = vrot.slane %v796, %v800
    %v803 = vadd.f32 %v788, %v801
    %v804 = vadd.f32 %v789, %v801
    %v805 = vadd.f32 %v790, %v801
    %v806 = vadd.f32 %v791, %v801
    %v807 = vadd.f32 %v792, %v801
    %v808 = vadd.f32 %v793, %v801
    %v809 = vadd.f32 %v794, %v801
    %v810 = vadd.f32 %v795, %v801
    %v811 = vmax.f32 %v803, 0.0
    %v812 = vmax.f32 %v804, 0.0
    %v813 = vmax.f32 %v805, 0.0
    %v814 = vmax.f32 %v806, 0.0
    %v815 = vmax.f32 %v807, 0.0
    %v816 = vmax.f32 %v808, 0.0
    %v817 = vmax.f32 %v809, 0.0
    %v818 = vmax.f32 %v810, 0.0
    %819 = vst.msk [vmem:[#allocation3] sm:$0xff] %vm246, %v811
    %820 = vst.msk [vmem:[#allocation3 + $0x8] sm:$0xff] %vm246, %v812
    %821 = vst.msk [vmem:[#allocation3 + $0x10] sm:$0xff] %vm246, %v813
    %822 = vst.msk [vmem:[#allocation3 + $0x18] sm:$0xff] %vm246, %v814
    %823 = vst.msk [vmem:[#allocation3 + $0x20] sm:$0xff] %vm246, %v815
    %824 = vst.msk [vmem:[#allocation3 + $0x28] sm:$0xff] %vm246, %v816
    %825 = vst.msk [vmem:[#allocation3 + $0x30] sm:$0xff] %vm246, %v817
    %826 = vst.msk [vmem:[#allocation3 + $0x38] sm:$0xff] %vm246, %v818
    %v827 = vld [vmem:[#allocation3] ss:$2 sm:$0xff]
    %s828 = scalar_lea.vmem [#allocation3], 16
    %v829 = vld [vmem:[%s828] ss:$2 sm:$0xff]
    %s830 = scalar_lea.vmem [#allocation3], 32
    %v831 = vld [vmem:[%s830] ss:$2 sm:$0xff]
    %s832 = scalar_lea.vmem [#allocation3], 48
    %v833 = vld [vmem:[%s832] ss:$2 sm:$0xff]
    %s834 = scalar_lea.vmem [#allocation3], 1
    %v835 = vld [vmem:[%s834] ss:$2 sm:$0xff]
    %s836 = scalar_lea.vmem [#allocation3], 17
    %v837 = vld [vmem:[%s836] ss:$2 sm:$0xff]
    %s838 = scalar_lea.vmem [#allocation3], 33
    %v839 = vld [vmem:[%s838] ss:$2 sm:$0xff]
    %s840 = scalar_lea.vmem [#allocation3], 49
    %v841 = vld [vmem:[%s840] ss:$2 sm:$0xff]
    %v842 = vmax.f32 %v827, %v835
    %v843 = vmax.f32 %v829, %v837
    %v844 = vmax.f32 %v831, %v839
    %v845 = vmax.f32 %v833, %v841
    %846 = vst.msk [vmem:[#allocation4] sm:$0xff] %vm246, %v842
    %847 = vst.msk [vmem:[#allocation4 + $0x8] sm:$0xff] %vm246, %v843
    %848 = vst.msk [vmem:[#allocation4 + $0x10] sm:$0xff] %vm246, %v844
    %849 = vst.msk [vmem:[#allocation4 + $0x18] sm:$0xff] %vm246, %v845
    %v850 = vld [vmem:[#allocation4] ss:$4 sm:$0xff]
    %v851 = vpack.c.bf16 %v850, %v850
    %v852 = vld [vmem:[%s5] sm:$0xf]
    %v853 = vld [vmem:[%s5 + $0x4] sm:$0xf]
    %v854 = vld [vmem:[%s5 + $0x8] sm:$0xf]
    %v855 = vld [vmem:[%s5 + $0xc] sm:$0xf]
    %s856 = scalar_lea.vmem [#allocation4], 1
    %v857 = vld [vmem:[%s856] ss:$4 sm:$0xff]
    %v858 = vpack.c.bf16 %v857, %v857
    %v859 = vld [vmem:[%s5 + $0x10] sm:$0xf]
    %v860 = vld [vmem:[%s5 + $0x14] sm:$0xf]
    %v861 = vld [vmem:[%s5 + $0x18] sm:$0xf]
    %v862 = vld [vmem:[%s5 + $0x1c] sm:$0xf]
    %v867 = vunpack.c.l.b16 %v859
    %v868 = vunpack.c.l.b16 %v860
    %v869 = vunpack.c.l.b16 %v861
    %v870 = vunpack.c.l.b16 %v862
    %v871 = vpack.c.b16 %v868, %v867
    %v872 = vpack.c.b16 %v870, %v869
    %v876 = vsel %vm246, %v858, 0
    %878 = vmatprep.subr.bf16.mxu0 0
    %879 = vmatpush1.bf16.msra.mxu0 %v871
    %880 = vmatprep.subr.bf16.mxu0 0
    %881 = vmatpush1.bf16.msra.mxu0 %v872
    %882 = vmatprep.subr.bf16.mxu0 0
    %883 = vmatpush1.bf16.msra.mxu0 0
    %884 = vmatprep.subr.bf16.mxu0 0
    %885 = vmatpush1.bf16.msra.mxu0 0
    %886 = vmatprep.subr.bf16.mxu0 0
    %887 = vmatpush1.bf16.msra.mxu0 0
    %888 = vmatprep.subr.bf16.mxu0 0
    %889 = vmatpush1.bf16.msra.mxu0 0
    %890 = vmatprep.subr.bf16.mxu0 0
    %891 = vmatpush1.bf16.msra.mxu0 0
    %892 = vmatprep.subr.bf16.mxu0 0
    %893 = vmatpush1.bf16.msra.mxu0 0
    %894 = vmatprep.subr.bf16.mxu0 0
    %895 = vmatpush1.bf16.msra.mxu0 0
    %896 = vmatprep.subr.bf16.mxu0 0
    %897 = vmatpush1.bf16.msra.mxu0 0
    %898 = vmatprep.subr.bf16.mxu0 0
    %899 = vmatpush1.bf16.msra.mxu0 0
    %900 = vmatprep.subr.bf16.mxu0 0
    %901 = vmatpush1.bf16.msra.mxu0 0
    %902 = vmatprep.subr.bf16.mxu0 0
    %903 = vmatpush1.bf16.msra.mxu0 0
    %904 = vmatprep.subr.bf16.mxu0 0
    %905 = vmatpush1.bf16.msra.mxu0 0
    %906 = vmatprep.subr.bf16.mxu0 0
    %907 = vmatpush1.bf16.msra.mxu0 0
    %908 = vmatprep.subr.bf16.mxu0 0
    %909 = vmatpush1.bf16.msra.mxu0 0
    %910 = vmatprep.mubr.bf16.mxu0 0
    %911 = vmatmul.mubr.bf16.gmra.mrb[0].mxu0 %v876
    %v912 = vpop.f32.mrb[0].mxu0
    %v913 = vadd.f32 0.0, %v912
    %v914 = vpop.f32.mrb[0].mxu0
    %v915 = vpop.f32.mrb[0].mxu0
    %v916 = vpop.f32.mrb[0].mxu0
    %917 = vdwg.mxu0
    %v922 = vunpack.c.l.b16 %v852
    %v923 = vunpack.c.l.b16 %v853
    %v924 = vunpack.c.l.b16 %v854
    %v925 = vunpack.c.l.b16 %v855
    %v926 = vpack.c.b16 %v923, %v922
    %v927 = vpack.c.b16 %v925, %v924
    %v931 = vsel %vm246, %v851, 0
    %933 = vmatprep.subr.bf16.mxu0 0
    %934 = vmatpush1.bf16.msra.mxu0 %v926
    %935 = vmatprep.subr.bf16.mxu0 0
    %936 = vmatpush1.bf16.msra.mxu0 %v927
    %937 = vmatprep.subr.bf16.mxu0 0
    %938 = vmatpush1.bf16.msra.mxu0 0
    %939 = vmatprep.subr.bf16.mxu0 0
    %940 = vmatpush1.bf16.msra.mxu0 0
    %941 = vmatprep.subr.bf16.mxu0 0
    %942 = vmatpush1.bf16.msra.mxu0 0
    %943 = vmatprep.subr.bf16.mxu0 0
    %944 = vmatpush1.bf16.msra.mxu0 0
    %945 = vmatprep.subr.bf16.mxu0 0
    %946 = vmatpush1.bf16.msra.mxu0 0
    %947 = vmatprep.subr.bf16.mxu0 0
    %948 = vmatpush1.bf16.msra.mxu0 0
    %949 = vmatprep.subr.bf16.mxu0 0
    %950 = vmatpush1.bf16.msra.mxu0 0
    %951 = vmatprep.subr.bf16.mxu0 0
    %952 = vmatpush1.bf16.msra.mxu0 0
    %953 = vmatprep.subr.bf16.mxu0 0
    %954 = vmatpush1.bf16.msra.mxu0 0
    %955 = vmatprep.subr.bf16.mxu0 0
    %956 = vmatpush1.bf16.msra.mxu0 0
    %957 = vmatprep.subr.bf16.mxu0 0
    %958 = vmatpush1.bf16.msra.mxu0 0
    %959 = vmatprep.subr.bf16.mxu0 0
    %960 = vmatpush1.bf16.msra.mxu0 0
    %961 = vmatprep.subr.bf16.mxu0 0
    %962 = vmatpush1.bf16.msra.mxu0 0
    %963 = vmatprep.subr.bf16.mxu0 0
    %964 = vmatpush1.bf16.msra.mxu0 0
    %965 = vmatprep.mubr.bf16.mxu0 0
    %966 = vmatmul.mubr.bf16.gmra.mrb[0].mxu0 %v931
    %v967 = vpop.f32.mrb[0].mxu0
    %v968 = vadd.f32 %v913, %v967
    %v969 = vpop.f32.mrb[0].mxu0
    %v970 = vpop.f32.mrb[0].mxu0
    %v971 = vpop.f32.mrb[0].mxu0
    %972 = vdwg.mxu0
    %s973 = scalar_lea.vmem [#allocation4], 2
    %v974 = vld [vmem:[%s973] ss:$4 sm:$0xff]
    %v975 = vpack.c.bf16 %v974, %v974
    %v976 = vld [vmem:[%s5 + $0x20] sm:$0xf]
    %v977 = vld [vmem:[%s5 + $0x24] sm:$0xf]
    %v978 = vld [vmem:[%s5 + $0x28] sm:$0xf]
    %v979 = vld [vmem:[%s5 + $0x2c] sm:$0xf]
    %v984 = vunpack.c.l.b16 %v976
    %v985 = vunpack.c.l.b16 %v977
    %v986 = vunpack.c.l.b16 %v978
    %v987 = vunpack.c.l.b16 %v979
    %v988 = vpack.c.b16 %v985, %v984
    %v989 = vpack.c.b16 %v987, %v986
    %v993 = vsel %vm246, %v975, 0
    %995 = vmatprep.subr.bf16.mxu0 0
    %996 = vmatpush1.bf16.msra.mxu0 %v988
    %997 = vmatprep.subr.bf16.mxu0 0
    %998 = vmatpush1.bf16.msra.mxu0 %v989
    %999 = vmatprep.subr.bf16.mxu0 0
    %1000 = vmatpush1.bf16.msra.mxu0 0
    %1001 = vmatprep.subr.bf16.mxu0 0
    %1002 = vmatpush1.bf16.msra.mxu0 0
    %1003 = vmatprep.subr.bf16.mxu0 0
    %1004 = vmatpush1.bf16.msra.mxu0 0
    %1005 = vmatprep.subr.bf16.mxu0 0
    %1006 = vmatpush1.bf16.msra.mxu0 0
    %1007 = vmatprep.subr.bf16.mxu0 0
    %1008 = vmatpush1.bf16.msra.mxu0 0
    %1009 = vmatprep.subr.bf16.mxu0 0
    %1010 = vmatpush1.bf16.msra.mxu0 0
    %1011 = vmatprep.subr.bf16.mxu0 0
    %1012 = vmatpush1.bf16.msra.mxu0 0
    %1013 = vmatprep.subr.bf16.mxu0 0
    %1014 = vmatpush1.bf16.msra.mxu0 0
    %1015 = vmatprep.subr.bf16.mxu0 0
    %1016 = vmatpush1.bf16.msra.mxu0 0
    %1017 = vmatprep.subr.bf16.mxu0 0
    %1018 = vmatpush1.bf16.msra.mxu0 0
    %1019 = vmatprep.subr.bf16.mxu0 0
    %1020 = vmatpush1.bf16.msra.mxu0 0
    %1021 = vmatprep.subr.bf16.mxu0 0
    %1022 = vmatpush1.bf16.msra.mxu0 0
    %1023 = vmatprep.subr.bf16.mxu0 0
    %1024 = vmatpush1.bf16.msra.mxu0 0
    %1025 = vmatprep.subr.bf16.mxu0 0
    %1026 = vmatpush1.bf16.msra.mxu0 0
    %1027 = vmatprep.mubr.bf16.mxu0 0
    %1028 = vmatmul.mubr.bf16.gmra.mrb[0].mxu0 %v993
    %v1029 = vpop.f32.mrb[0].mxu0
    %v1030 = vadd.f32 0.0, %v1029
    %v1031 = vpop.f32.mrb[0].mxu0
    %v1032 = vpop.f32.mrb[0].mxu0
    %v1033 = vpop.f32.mrb[0].mxu0
    %1034 = vdwg.mxu0
    %v1035 = vadd.f32 %v968, %v1030
    %s1036 = scalar_lea.vmem [#allocation4], 3
    %v1037 = vld [vmem:[%s1036] ss:$4 sm:$0xff]
    %v1038 = vpack.c.bf16 %v1037, %v1037
    %v1039 = vld [vmem:[%s5 + $0x30] sm:$0xf]
    %v1040 = vld [vmem:[%s5 + $0x34] sm:$0xf]
    %v1041 = vld [vmem:[%s5 + $0x38] sm:$0xf]
    %v1042 = vld [vmem:[%s5 + $0x3c] sm:$0xf]
    %v1047 = vunpack.c.l.b16 %v1039
    %v1048 = vunpack.c.l.b16 %v1040
    %v1049 = vunpack.c.l.b16 %v1041
    %v1050 = vunpack.c.l.b16 %v1042
    %v1051 = vpack.c.b16 %v1048, %v1047
    %v1052 = vpack.c.b16 %v1050, %v1049
    %v1056 = vsel %vm246, %v1038, 0
    %1058 = vmatprep.subr.bf16.mxu0 0
    %1059 = vmatpush1.bf16.msra.mxu0 %v1051
    %1060 = vmatprep.subr.bf16.mxu0 0
    %1061 = vmatpush1.bf16.msra.mxu0 %v1052
    %1062 = vmatprep.subr.bf16.mxu0 0
    %1063 = vmatpush1.bf16.msra.mxu0 0
    %1064 = vmatprep.subr.bf16.mxu0 0
    %1065 = vmatpush1.bf16.msra.mxu0 0
    %1066 = vmatprep.subr.bf16.mxu0 0
    %1067 = vmatpush1.bf16.msra.mxu0 0
    %1068 = vmatprep.subr.bf16.mxu0 0
    %1069 = vmatpush1.bf16.msra.mxu0 0
    %1070 = vmatprep.subr.bf16.mxu0 0
    %1071 = vmatpush1.bf16.msra.mxu0 0
    %1072 = vmatprep.subr.bf16.mxu0 0
    %1073 = vmatpush1.bf16.msra.mxu0 0
    %1074 = vmatprep.subr.bf16.mxu0 0
    %1075 = vmatpush1.bf16.msra.mxu0 0
    %1076 = vmatprep.subr.bf16.mxu0 0
    %1077 = vmatpush1.bf16.msra.mxu0 0
    %1078 = vmatprep.subr.bf16.mxu0 0
    %1079 = vmatpush1.bf16.msra.mxu0 0
    %1080 = vmatprep.subr.bf16.mxu0 0
    %1081 = vmatpush1.bf16.msra.mxu0 0
    %1082 = vmatprep.subr.bf16.mxu0 0
    %1083 = vmatpush1.bf16.msra.mxu0 0
    %1084 = vmatprep.subr.bf16.mxu0 0
    %1085 = vmatpush1.bf16.msra.mxu0 0
    %1086 = vmatprep.subr.bf16.mxu0 0
    %1087 = vmatpush1.bf16.msra.mxu0 0
    %1088 = vmatprep.subr.bf16.mxu0 0
    %1089 = vmatpush1.bf16.msra.mxu0 0
    %1090 = vmatprep.mubr.bf16.mxu0 0
    %1091 = vmatmul.mubr.bf16.gmra.mrb[0].mxu0 %v1056
    %v1092 = vpop.f32.mrb[0].mxu0
    %v1093 = vadd.f32 0.0, %v1092
    %v1094 = vpop.f32.mrb[0].mxu0
    %v1095 = vpop.f32.mrb[0].mxu0
    %v1096 = vpop.f32.mrb[0].mxu0
    %1097 = vdwg.mxu0
    %v1098 = vadd.f32 %v1035, %v1093
    %v1099 = vld [vmem:[%s6] sm:$0x1]
    %v1101 = vlaneseq
    %v1102 = vshrl.u32 %v1101, 7
    %v1103 = vsub.s32 0, %v1102
    %v1104 = vrot.slane %v1099, %v1103
    %v1106 = vadd.f32 %v1098, %v1104
    %v1107 = vmax.f32 %v1106, 0.0
    %v1108 = vpack.c.bf16 %v1107, %v1107
    %v1109 = vld [vmem:[%s7] sm:$0xf]
    %v1110 = vld [vmem:[%s7 + $0x4] sm:$0xf]
    %v1111 = vld [vmem:[%s7 + $0x8] sm:$0xf]
    %v1112 = vld [vmem:[%s7 + $0xc] sm:$0xf]
    %v1113 = vld [vmem:[%s8] sm:$0x1]
    %v1115 = vlaneseq
    %v1116 = vshrl.u32 %v1115, 7
    %v1117 = vsub.s32 0, %v1116
    %v1118 = vrot.slane %v1113, %v1117
    %v1124 = vunpack.c.l.b16 %v1109
    %v1125 = vunpack.c.l.b16 %v1110
    %v1126 = vunpack.c.l.b16 %v1111
    %v1127 = vunpack.c.l.b16 %v1112
    %v1128 = vpack.c.b16 %v1125, %v1124
    %v1129 = vpack.c.b16 %v1127, %v1126
    %v1133 = vsel %vm246, %v1108, 0
    %1135 = vmatprep.subr.bf16.mxu0 0
    %1136 = vmatpush1.bf16.msra.mxu0 %v1128
    %1137 = vmatprep.subr.bf16.mxu0 0
    %1138 = vmatpush1.bf16.msra.mxu0 %v1129
    %1139 = vmatprep.subr.bf16.mxu0 0
    %1140 = vmatpush1.bf16.msra.mxu0 0
    %1141 = vmatprep.subr.bf16.mxu0 0
    %1142 = vmatpush1.bf16.msra.mxu0 0
    %1143 = vmatprep.subr.bf16.mxu0 0
    %1144 = vmatpush1.bf16.msra.mxu0 0
    %1145 = vmatprep.subr.bf16.mxu0 0
    %1146 = vmatpush1.bf16.msra.mxu0 0
    %1147 = vmatprep.subr.bf16.mxu0 0
    %1148 = vmatpush1.bf16.msra.mxu0 0
    %1149 = vmatprep.subr.bf16.mxu0 0
    %1150 = vmatpush1.bf16.msra.mxu0 0
    %1151 = vmatprep.subr.bf16.mxu0 0
    %1152 = vmatpush1.bf16.msra.mxu0 0
    %1153 = vmatprep.subr.bf16.mxu0 0
    %1154 = vmatpush1.bf16.msra.mxu0 0
    %1155 = vmatprep.subr.bf16.mxu0 0
    %1156 = vmatpush1.bf16.msra.mxu0 0
    %1157 = vmatprep.subr.bf16.mxu0 0
    %1158 = vmatpush1.bf16.msra.mxu0 0
    %1159 = vmatprep.subr.bf16.mxu0 0
    %1160 = vmatpush1.bf16.msra.mxu0 0
    %1161 = vmatprep.subr.bf16.mxu0 0
    %1162 = vmatpush1.bf16.msra.mxu0 0
    %1163 = vmatprep.subr.bf16.mxu0 0
    %1164 = vmatpush1.bf16.msra.mxu0 0
    %1165 = vmatprep.subr.bf16.mxu0 0
    %1166 = vmatpush1.bf16.msra.mxu0 0
    %1167 = vmatprep.mubr.bf16.mxu0 0
    %1168 = vmatmul.mubr.bf16.gmra.mrb[0].mxu0 %v1133
    %v1169 = vpop.f32.mrb[0].mxu0
    %v1170 = vadd.f32 %v1118, %v1169
    %v1171 = vpop.f32.mrb[0].mxu0
    %v1172 = vpop.f32.mrb[0].mxu0
    %v1173 = vpop.f32.mrb[0].mxu0
    %1174 = vdwg.mxu0
    %1175 = vst [vmem:[#allocation5] sm:$0xff] %v1170
    // Predicated region
    $region38: #{tpu_custom_call.1} parent=1 // pred_check
      _
    $region39: #{tpu_custom_call.1} parent=1 // pred_check_branch
      %1177 = sbr.rel (0) target = $region41
    $region40: #{tpu_custom_call.1} parent=1 // pred_region
      %s1179 = ssub.s32 128, 128
      %1180 = vsyncadd [#allocation6], %s1179
      %s1182 = sshll.u32 [#allocation5], 4
      %s1183 = int_to_ptr.vmem [resolvable:$true] %s1182
      %1185 = dma.vmem_to_hbm [thread:$0]  %s1183, 128, %s9, [#allocation6]
    $region41: #{tpu_custom_call.1} parent=1 // pred_fallthru
      _
    // Predicated region
    $region42: #{tpu_custom_call.1} parent=1 // pred_check
      _
    $region43: #{tpu_custom_call.1} parent=1 // pred_check_branch
      %1187 = sbr.rel (0) target = $region45
    $region44: #{tpu_custom_call.1} parent=1 // pred_region
      %1188 = dma.done [#allocation6], 128
    $region45: #{tpu_custom_call.1} parent=1 // pred_fallthru
      _
    %1189 = vsyncpa [#allocation6], 1

</llo_original>
